<compile_context>
chip_gen: v7x
topology: tpu7x:2x2x1
jax: 0.10.0
libtpu: 0.0.40
codegen_flags: <defaults>
</compile_context>

<pallas_src>
import functools
import math

import numpy as np
import jax
import jax.numpy as jnp
from jax.experimental import pallas as pl
from jax.experimental.pallas import tpu as pltpu

# ---------------------------------------------------------------------------
# Model hyperparameters (shapes implied by the PyTorch module __init__)
# ---------------------------------------------------------------------------
MAX_ATOMIC_NUM = 100
# ATOM_FDIM = sum(len(choices)+1) + 2 = (100+1)+(6+1)+(5+1)+(4+1)+(5+1)+(5+1)+2 = 133
ATOM_FDIM = (MAX_ATOMIC_NUM + 1) + 7 + 6 + 5 + 6 + 6 + 2
BOND_FDIM = 14
BOND_INPUT_FDIM = BOND_FDIM + ATOM_FDIM          # 147 (atom_messages=False)
HIDDEN = 32
FFN_HIDDEN = 32
OUTPUT_SIZE = 3                                  # args.num_tasks
DEPTH = 3

# lane-aligned padded dims used inside the kernel
ATOM_F_PAD = 256
BOND_F_PAD = 256
H_PAD = 128
OUT_PAD = 128


def round_up(x, m):
    return ((x + m - 1) // m) * m


def pad2d(x, shape):
    x = jnp.asarray(x)
    return jnp.zeros(shape, x.dtype).at[:x.shape[0], :x.shape[1]].set(x)


# ---------------------------------------------------------------------------
# Pallas kernel: full DMPNN forward (encoder message passing + readout + FFN)
# ---------------------------------------------------------------------------
def dmpnn_kernel(f_atoms_ref, f_bonds_ref, msg_mat_ref, a2b_ref, pool_ref,
                 w_i_ref, w_h_ref, w_o_atom_ref, w_o_msg_ref, b_o_ref,
                 w_ffn1_ref, b_ffn1_ref, w_ffn2_ref, b_ffn2_ref,
                 out_ref, *, depth):
    f32, bf16 = jnp.float32, jnp.bfloat16
    dot = lambda a, b: jnp.dot(a, b, preferred_element_type=f32)   # bf16 in, f32 acc

    # input = W_i(f_bonds); message = ReLU(input).  `inp` stays f32 for the residual,
    # `message` is kept bf16 (it is only ever consumed as an MXU operand).
    inp = dot(f_bonds_ref[...], w_i_ref[...])                 # (NB_PAD, H_PAD) f32
    message = jnp.maximum(inp, 0.0).astype(bf16)

    # Message passing.  msg_mat = b2a_sel @ a2b_sel - b2revb_sel (precomputed host-side)
    # fuses  a_message = sum-over-incoming-bonds,  a_message[b2a],  - message[b2revb]
    # into one matmul per depth step.  depth=3 -> loop unrolled twice (switch to
    # lax.fori_loop if depth grows).
    for _ in range(depth - 1):
        agg = dot(msg_mat_ref[...], message)                  # (NB_PAD, H_PAD) f32
        upd = dot(agg.astype(bf16), w_h_ref[...])             # W_h (bias=False)
        message = jnp.maximum(inp + upd, 0.0).astype(bf16)    # dropout(p=0) == identity

    # readout: a_message = index_select_ND(message, a2b).sum(dim=1)
    a_message = dot(a2b_ref[...], message)                    # (NA_PAD, H_PAD) f32
    # atom_hiddens = ReLU(W_o(cat([f_atoms, a_message], dim=1)))  (concat split in two)
    atom_h = jnp.maximum(
        dot(f_atoms_ref[...], w_o_atom_ref[...])
        + dot(a_message.astype(bf16), w_o_msg_ref[...])
        + b_o_ref[...],
        0.0)                                                  # (NA_PAD, H_PAD) f32

    # per-molecule mean pooling over a_scope (pool rows hold 1/n_atoms weights, f32)
    mol_vecs = dot(pool_ref[...], atom_h)                     # (NMOL_PAD, H_PAD) f32

    # FFN: dropout -> Linear -> ReLU -> dropout -> Linear  (regression: no sigmoid)
    h = jnp.maximum(dot(mol_vecs.astype(bf16), w_ffn1_ref[...]) + b_ffn1_ref[...], 0.0)
    out = dot(h.astype(bf16), w_ffn2_ref[...]) + b_ffn2_ref[...]
    out_ref[...] = out.astype(out_ref.dtype)                  # lane-dense (OUT_PAD=128)


@functools.partial(jax.jit, static_argnames=("n_mols", "out_size", "depth"))
def dmpnn_forward(f_atoms, f_bonds, msg_mat, a2b_mat, pool,
                  w_i, w_h, w_o_atom, w_o_msg, b_o,
                  w_ffn1, b_ffn1, w_ffn2, b_ffn2,
                  n_mols, out_size, depth=DEPTH):
    nmol_pad, out_pad = pool.shape[0], w_ffn2.shape[1]
    nb, na = f_bonds.shape[0], f_atoms.shape[0]
    bfdim, afdim, h = f_bonds.shape[1], f_atoms.shape[1], w_i.shape[1]

    args = (f_atoms, f_bonds, msg_mat, a2b_mat, pool,
            w_i, w_h, w_o_atom, w_o_msg, b_o, w_ffn1, b_ffn1, w_ffn2, b_ffn2)

    flops = 2 * (nb * bfdim * h
                 + (depth - 1) * (nb * nb * h + nb * h * h)
                 + na * nb * h + na * afdim * h + na * h * h
                 + nmol_pad * na * h
                 + nmol_pad * (h * h + h * out_pad))
    bytes_accessed = sum(int(np.prod(a.shape)) * a.dtype.itemsize for a in args) \
        + nmol_pad * out_pad * 4

    vmem = pl.BlockSpec(memory_space=pltpu.MemorySpace.VMEM)
    out_p = pl.pallas_call(
        functools.partial(dmpnn_kernel, depth=depth),
        out_shape=jax.ShapeDtypeStruct((nmol_pad, out_pad), jnp.float32),
        in_specs=[vmem] * len(args),
        out_specs=vmem,
        compiler_params=pltpu.CompilerParams(vmem_limit_bytes=32 * 1024 * 1024),
        cost_estimate=pl.CostEstimate(flops=flops, transcendentals=0,
                                      bytes_accessed=bytes_accessed),
    )(*args)
    # drop row / lane padding (real molecules, real tasks)
    return out_p[:n_mols, :out_size]


# ---------------------------------------------------------------------------
# Host-side graph construction (BatchMolGraph-style index arrays, synthetic)
# ---------------------------------------------------------------------------
def build_graph():
    # Two molecules (chains) of 7 and 8 atoms; atom 0 / bond 0 are padding rows.
    mol_sizes = [7, 8]
    n_atoms = 1 + sum(mol_sizes)
    a_scope = []
    a2b_list = [[] for _ in range(n_atoms)]
    b2a = [0]
    b2revb = [0]
    a_start, b_idx = 1, 1
    for size in mol_sizes:
        a_scope.append((a_start, size))
        for k in range(size - 1):
            a1, a2 = a_start + k, a_start + k + 1
            # directed bond a1->a2 (index b_idx) arrives at a2, originates at a1
            b2a.append(a1); a2b_list[a2].append(b_idx)
            # reverse bond a2->a1 (index b_idx + 1)
            b2a.append(a2); a2b_list[a1].append(b_idx + 1)
            b2revb.append(b_idx + 1); b2revb.append(b_idx)
            b_idx += 2
        a_start += size
    n_bonds = b_idx
    max_nb = max(1, max(len(x) for x in a2b_list))
    a2b = np.array([x + [0] * (max_nb - len(x)) for x in a2b_list], dtype=np.int32)
    return (np.array(b2a, np.int32), np.array(b2revb, np.int32), a2b,
            a_scope, n_atoms, n_bonds)


def build_dense_graph_mats(a2b, b2a, b2revb, a_scope, n_atoms, n_bonds,
                           na_pad, nb_pad, nmol_pad):
    # A2B[a, b] = multiplicity of bond b among atom a's (padded) incoming bonds
    a2b_mat = np.zeros((na_pad, nb_pad), np.float32)
    for a in range(n_atoms):
        for b in a2b[a]:
            a2b_mat[a, b] += 1.0
    b2a_mat = np.zeros((nb_pad, na_pad), np.float32)
    b2a_mat[np.arange(n_bonds), b2a] = 1.0
    b2revb_mat = np.zeros((nb_pad, nb_pad), np.float32)
    b2revb_mat[np.arange(n_bonds), b2revb] = 1.0
    # fused per-depth-step message operator:
    #   message_pre_new = (b2a_sel @ a2b_sel - b2revb_sel) @ message
    msg_mat = b2a_mat @ a2b_mat - b2revb_mat      # small integers, exact in bf16
    pool = np.zeros((nmol_pad, na_pad), np.float32)
    for i, (s, n) in enumerate(a_scope):
        pool[i, s:s + n] = 1.0 / n
    return (jnp.asarray(msg_mat, dtype=jnp.bfloat16),
            jnp.asarray(a2b_mat, dtype=jnp.bfloat16),
            jnp.asarray(pool, dtype=jnp.float32))


def xavier(key, fan_in, fan_out):
    std = math.sqrt(2.0 / (fan_in + fan_out))
    return jax.random.normal(key, (fan_in, fan_out), jnp.float32) * std


# Pure-JAX reference: literal translation of the PyTorch forward with real gathers,
# mirroring the kernel's bf16-operand / f32-accumulation casting points.
def ref_forward(f_atoms, f_bonds, a2b, b2a, b2revb, a_scope,
                w_i, w_h, w_o_atom, w_o_msg, b_o, w_ffn1, b_ffn1, w_ffn2, b_ffn2,
                depth):
    bf16, f32 = jnp.bfloat16, jnp.float32
    dot = lambda a, b: jnp.dot(a.astype(bf16), b.astype(bf16),
                               preferred_element_type=f32)
    inp = dot(f_bonds, w_i)
    message = jnp.maximum(inp, 0.0)
    for _ in range(depth - 1):
        msg_b = message.astype(bf16).astype(f32)
        a_message = msg_b[a2b].sum(axis=1)
        rev = msg_b[b2revb]
        agg = a_message[b2a] - rev
        message = jnp.maximum(inp + dot(agg, w_h), 0.0)
    msg_b = message.astype(bf16).astype(f32)
    a_message = msg_b[a2b].sum(axis=1)
    atom_h = jnp.maximum(dot(f_atoms, w_o_atom) + dot(a_message, w_o_msg) + b_o, 0.0)
    mol_vecs = jnp.stack([atom_h[s:s + n].sum(axis=0) / n for (s, n) in a_scope])
    h = jnp.maximum(dot(mol_vecs, w_ffn1) + b_ffn1, 0.0)
    return dot(h, w_ffn2) + b_ffn2


if __name__ == "__main__":
    key = jax.random.PRNGKey(0)
    k_fa, k_fb, k_wi, k_wh, k_wo, k_f1, k_f2 = jax.random.split(key, 7)

    b2a, b2revb, a2b, a_scope, n_atoms, n_bonds = build_graph()
    NA_PAD = round_up(n_atoms, 128)
    NB_PAD = round_up(n_bonds, 128)
    NMOL_PAD = round_up(len(a_scope), 8)

    msg_mat, a2b_mat, pool = build_dense_graph_mats(
        a2b, b2a, b2revb, a_scope, n_atoms, n_bonds, NA_PAD, NB_PAD, NMOL_PAD)

    # features (row 0 is the zero padding atom/bond, as in BatchMolGraph), bf16
    f_atoms = jax.random.normal(k_fa, (n_atoms, ATOM_FDIM), jnp.float32)
    f_atoms = f_atoms.at[0].set(0.0).astype(jnp.bfloat16)
    f_bonds = jax.random.normal(k_fb, (n_bonds, BOND_INPUT_FDIM), jnp.float32)
    f_bonds = f_bonds.at[0].set(0.0).astype(jnp.bfloat16)

    # parameters: xavier_normal for matrices, zeros for biases (initialize_weights)
    w_i = xavier(k_wi, BOND_INPUT_FDIM, HIDDEN).astype(jnp.bfloat16)     # W_i (bias=False)
    w_h = xavier(k_wh, HIDDEN, HIDDEN).astype(jnp.bfloat16)              # W_h (bias=False)
    w_o = xavier(k_wo, ATOM_FDIM + HIDDEN, HIDDEN).astype(jnp.bfloat16)  # W_o (bias=0)
    w_o_atom, w_o_msg = w_o[:ATOM_FDIM], w_o[ATOM_FDIM:]
    b_o = jnp.zeros((1, HIDDEN), jnp.float32)
    w_ffn1 = xavier(k_f1, FFN_HIDDEN, FFN_HIDDEN).astype(jnp.bfloat16)   # ffn Linear 1 (bias=0)
    b_ffn1 = jnp.zeros((1, FFN_HIDDEN), jnp.float32)
    w_ffn2 = xavier(k_f2, FFN_HIDDEN, OUTPUT_SIZE).astype(jnp.bfloat16)  # ffn Linear 2 (bias=0)
    b_ffn2 = jnp.zeros((1, OUTPUT_SIZE), jnp.float32)

    # lane/sublane-aligned, zero-padded copies for the kernel (padding is exact)
    f_atoms_p = pad2d(f_atoms, (NA_PAD, ATOM_F_PAD))
    f_bonds_p = pad2d(f_bonds, (NB_PAD, BOND_F_PAD))
    w_i_p = pad2d(w_i, (BOND_F_PAD, H_PAD))
    w_h_p = pad2d(w_h, (H_PAD, H_PAD))
    w_o_atom_p = pad2d(w_o_atom, (ATOM_F_PAD, H_PAD))
    w_o_msg_p = pad2d(w_o_msg, (H_PAD, H_PAD))
    b_o_p = pad2d(b_o, (1, H_PAD))
    w_ffn1_p = pad2d(w_ffn1, (H_PAD, H_PAD))
    b_ffn1_p = pad2d(b_ffn1, (1, H_PAD))
    w_ffn2_p = pad2d(w_ffn2, (H_PAD, OUT_PAD))
    b_ffn2_p = pad2d(b_ffn2, (1, OUT_PAD))

    out = dmpnn_forward(f_atoms_p, f_bonds_p, msg_mat, a2b_mat, pool,
                        w_i_p, w_h_p, w_o_atom_p, w_o_msg_p, b_o_p,
                        w_ffn1_p, b_ffn1_p, w_ffn2_p, b_ffn2_p,
                        n_mols=len(a_scope), out_size=OUTPUT_SIZE, depth=DEPTH)
    out = jax.block_until_ready(out)

    ref = ref_forward(f_atoms, f_bonds, jnp.asarray(a2b), jnp.asarray(b2a),
                      jnp.asarray(b2revb), a_scope,
                      w_i, w_h, w_o_atom, w_o_msg, b_o,
                      w_ffn1, b_ffn1, w_ffn2, b_ffn2, DEPTH)
    np.testing.assert_allclose(np.asarray(out, np.float32), np.asarray(ref, np.float32),
                               rtol=2e-2, atol=2e-2)
    print("KERNEL_OK")
</pallas_src>

<mosaic_0001>
module attributes {stable_mosaic.version = 11 : i64} {
  func.func @dmpnn_kernel(%arg0: memref<128x256xbf16, #tpu.memory_space<vmem>>, %arg1: memref<128x256xbf16, #tpu.memory_space<vmem>>, %arg2: memref<128x128xbf16, #tpu.memory_space<vmem>>, %arg3: memref<128x128xbf16, #tpu.memory_space<vmem>>, %arg4: memref<8x128xf32, #tpu.memory_space<vmem>>, %arg5: memref<256x128xbf16, #tpu.memory_space<vmem>>, %arg6: memref<128x128xbf16, #tpu.memory_space<vmem>>, %arg7: memref<256x128xbf16, #tpu.memory_space<vmem>>, %arg8: memref<128x128xbf16, #tpu.memory_space<vmem>>, %arg9: memref<1x128xf32, #tpu.memory_space<vmem>>, %arg10: memref<128x128xbf16, #tpu.memory_space<vmem>>, %arg11: memref<1x128xf32, #tpu.memory_space<vmem>>, %arg12: memref<128x128xbf16, #tpu.memory_space<vmem>>, %arg13: memref<1x128xf32, #tpu.memory_space<vmem>>, %arg14: memref<8x128xf32, #tpu.memory_space<vmem>>) attributes {dimension_semantics = [], scalar_prefetch = 0 : i64, scratch_operands = 0 : i64, tpu.core_type = #tpu.core_type<tc>} {
    %c0 = arith.constant 0 : index
    %c0_0 = arith.constant 0 : index
    %0 = vector.load %arg1[%c0, %c0_0] : memref<128x256xbf16, #tpu.memory_space<vmem>>, vector<128x256xbf16>
    %c0_1 = arith.constant 0 : index
    %c0_2 = arith.constant 0 : index
    %1 = vector.load %arg5[%c0_1, %c0_2] : memref<256x128xbf16, #tpu.memory_space<vmem>>, vector<256x128xbf16>
    %cst = arith.constant dense<0.000000e+00> : vector<128x128xf32>
    %2 = tpu.matmul %0, %1, %cst {dimension_numbers = #tpu.dot_dimension_numbers<[1], [0], [0], [1], [0, 0, 1, 1], [], []>} : vector<128x256xbf16>, vector<256x128xbf16>, vector<128x128xf32> -> vector<128x128xf32>
    %cst_3 = arith.constant 0.000000e+00 : f32
    %3 = vector.broadcast %cst_3 : f32 to vector<128x128xf32>
    %4 = arith.maximumf %2, %3 : vector<128x128xf32>
    %5 = arith.truncf %4 : vector<128x128xf32> to vector<128x128xbf16>
    %c0_4 = arith.constant 0 : index
    %c0_5 = arith.constant 0 : index
    %6 = vector.load %arg2[%c0_4, %c0_5] : memref<128x128xbf16, #tpu.memory_space<vmem>>, vector<128x128xbf16>
    %cst_6 = arith.constant dense<0.000000e+00> : vector<128x128xf32>
    %7 = tpu.matmul %6, %5, %cst_6 {dimension_numbers = #tpu.dot_dimension_numbers<[1], [0], [0], [1], [0, 0, 1, 1], [], []>} : vector<128x128xbf16>, vector<128x128xbf16>, vector<128x128xf32> -> vector<128x128xf32>
    %8 = arith.truncf %7 : vector<128x128xf32> to vector<128x128xbf16>
    %c0_7 = arith.constant 0 : index
    %c0_8 = arith.constant 0 : index
    %9 = vector.load %arg6[%c0_7, %c0_8] : memref<128x128xbf16, #tpu.memory_space<vmem>>, vector<128x128xbf16>
    %cst_9 = arith.constant dense<0.000000e+00> : vector<128x128xf32>
    %10 = tpu.matmul %8, %9, %cst_9 {dimension_numbers = #tpu.dot_dimension_numbers<[1], [0], [0], [1], [0, 0, 1, 1], [], []>} : vector<128x128xbf16>, vector<128x128xbf16>, vector<128x128xf32> -> vector<128x128xf32>
    %11 = arith.addf %2, %10 : vector<128x128xf32>
    %cst_10 = arith.constant 0.000000e+00 : f32
    %12 = vector.broadcast %cst_10 : f32 to vector<128x128xf32>
    %13 = arith.maximumf %11, %12 : vector<128x128xf32>
    %14 = arith.truncf %13 : vector<128x128xf32> to vector<128x128xbf16>
    %c0_11 = arith.constant 0 : index
    %c0_12 = arith.constant 0 : index
    %15 = vector.load %arg2[%c0_11, %c0_12] : memref<128x128xbf16, #tpu.memory_space<vmem>>, vector<128x128xbf16>
    %cst_13 = arith.constant dense<0.000000e+00> : vector<128x128xf32>
    %16 = tpu.matmul %15, %14, %cst_13 {dimension_numbers = #tpu.dot_dimension_numbers<[1], [0], [0], [1], [0, 0, 1, 1], [], []>} : vector<128x128xbf16>, vector<128x128xbf16>, vector<128x128xf32> -> vector<128x128xf32>
    %17 = arith.truncf %16 : vector<128x128xf32> to vector<128x128xbf16>
    %c0_14 = arith.constant 0 : index
    %c0_15 = arith.constant 0 : index
    %18 = vector.load %arg6[%c0_14, %c0_15] : memref<128x128xbf16, #tpu.memory_space<vmem>>, vector<128x128xbf16>
    %cst_16 = arith.constant dense<0.000000e+00> : vector<128x128xf32>
    %19 = tpu.matmul %17, %18, %cst_16 {dimension_numbers = #tpu.dot_dimension_numbers<[1], [0], [0], [1], [0, 0, 1, 1], [], []>} : vector<128x128xbf16>, vector<128x128xbf16>, vector<128x128xf32> -> vector<128x128xf32>
    %20 = arith.addf %2, %19 : vector<128x128xf32>
    %cst_17 = arith.constant 0.000000e+00 : f32
    %21 = vector.broadcast %cst_17 : f32 to vector<128x128xf32>
    %22 = arith.maximumf %20, %21 : vector<128x128xf32>
    %23 = arith.truncf %22 : vector<128x128xf32> to vector<128x128xbf16>
    %c0_18 = arith.constant 0 : index
    %c0_19 = arith.constant 0 : index
    %24 = vector.load %arg3[%c0_18, %c0_19] : memref<128x128xbf16, #tpu.memory_space<vmem>>, vector<128x128xbf16>
    %cst_20 = arith.constant dense<0.000000e+00> : vector<128x128xf32>
    %25 = tpu.matmul %24, %23, %cst_20 {dimension_numbers = #tpu.dot_dimension_numbers<[1], [0], [0], [1], [0, 0, 1, 1], [], []>} : vector<128x128xbf16>, vector<128x128xbf16>, vector<128x128xf32> -> vector<128x128xf32>
    %c0_21 = arith.constant 0 : index
    %c0_22 = arith.constant 0 : index
    %26 = vector.load %arg0[%c0_21, %c0_22] : memref<128x256xbf16, #tpu.memory_space<vmem>>, vector<128x256xbf16>
    %c0_23 = arith.constant 0 : index
    %c0_24 = arith.constant 0 : index
    %27 = vector.load %arg7[%c0_23, %c0_24] : memref<256x128xbf16, #tpu.memory_space<vmem>>, vector<256x128xbf16>
    %cst_25 = arith.constant dense<0.000000e+00> : vector<128x128xf32>
    %28 = tpu.matmul %26, %27, %cst_25 {dimension_numbers = #tpu.dot_dimension_numbers<[1], [0], [0], [1], [0, 0, 1, 1], [], []>} : vector<128x256xbf16>, vector<256x128xbf16>, vector<128x128xf32> -> vector<128x128xf32>
    %29 = arith.truncf %25 : vector<128x128xf32> to vector<128x128xbf16>
    %c0_26 = arith.constant 0 : index
    %c0_27 = arith.constant 0 : index
    %30 = vector.load %arg8[%c0_26, %c0_27] : memref<128x128xbf16, #tpu.memory_space<vmem>>, vector<128x128xbf16>
    %cst_28 = arith.constant dense<0.000000e+00> : vector<128x128xf32>
    %31 = tpu.matmul %29, %30, %cst_28 {dimension_numbers = #tpu.dot_dimension_numbers<[1], [0], [0], [1], [0, 0, 1, 1], [], []>} : vector<128x128xbf16>, vector<128x128xbf16>, vector<128x128xf32> -> vector<128x128xf32>
    %32 = arith.addf %28, %31 : vector<128x128xf32>
    %c0_29 = arith.constant 0 : index
    %c0_30 = arith.constant 0 : index
    %33 = vector.load %arg9[%c0_29, %c0_30] : memref<1x128xf32, #tpu.memory_space<vmem>>, vector<1x128xf32>
    %34 = vector.broadcast %33 : vector<1x128xf32> to vector<128x128xf32>
    %35 = arith.addf %32, %34 : vector<128x128xf32>
    %cst_31 = arith.constant 0.000000e+00 : f32
    %36 = vector.broadcast %cst_31 : f32 to vector<128x128xf32>
    %37 = arith.maximumf %35, %36 : vector<128x128xf32>
    %c0_32 = arith.constant 0 : index
    %c0_33 = arith.constant 0 : index
    %38 = vector.load %arg4[%c0_32, %c0_33] : memref<8x128xf32, #tpu.memory_space<vmem>>, vector<8x128xf32>
    %cst_34 = arith.constant dense<0.000000e+00> : vector<8x128xf32>
    %39 = tpu.matmul %38, %37, %cst_34 {dimension_numbers = #tpu.dot_dimension_numbers<[1], [0], [0], [1], [0, 0, 1, 1], [], []>} : vector<8x128xf32>, vector<128x128xf32>, vector<8x128xf32> -> vector<8x128xf32>
    %40 = arith.truncf %39 : vector<8x128xf32> to vector<8x128xbf16>
    %c0_35 = arith.constant 0 : index
    %c0_36 = arith.constant 0 : index
    %41 = vector.load %arg10[%c0_35, %c0_36] : memref<128x128xbf16, #tpu.memory_space<vmem>>, vector<128x128xbf16>
    %cst_37 = arith.constant dense<0.000000e+00> : vector<8x128xf32>
    %42 = tpu.matmul %40, %41, %cst_37 {dimension_numbers = #tpu.dot_dimension_numbers<[1], [0], [0], [1], [0, 0, 1, 1], [], []>} : vector<8x128xbf16>, vector<128x128xbf16>, vector<8x128xf32> -> vector<8x128xf32>
    %c0_38 = arith.constant 0 : index
    %c0_39 = arith.constant 0 : index
    %43 = vector.load %arg11[%c0_38, %c0_39] : memref<1x128xf32, #tpu.memory_space<vmem>>, vector<1x128xf32>
    %44 = vector.broadcast %43 : vector<1x128xf32> to vector<8x128xf32>
    %45 = arith.addf %42, %44 : vector<8x128xf32>
    %cst_40 = arith.constant 0.000000e+00 : f32
    %46 = vector.broadcast %cst_40 : f32 to vector<8x128xf32>
    %47 = arith.maximumf %45, %46 : vector<8x128xf32>
    %48 = arith.truncf %47 : vector<8x128xf32> to vector<8x128xbf16>
    %c0_41 = arith.constant 0 : index
    %c0_42 = arith.constant 0 : index
    %49 = vector.load %arg12[%c0_41, %c0_42] : memref<128x128xbf16, #tpu.memory_space<vmem>>, vector<128x128xbf16>
    %cst_43 = arith.constant dense<0.000000e+00> : vector<8x128xf32>
    %50 = tpu.matmul %48, %49, %cst_43 {dimension_numbers = #tpu.dot_dimension_numbers<[1], [0], [0], [1], [0, 0, 1, 1], [], []>} : vector<8x128xbf16>, vector<128x128xbf16>, vector<8x128xf32> -> vector<8x128xf32>
    %c0_44 = arith.constant 0 : index
    %c0_45 = arith.constant 0 : index
    %51 = vector.load %arg13[%c0_44, %c0_45] : memref<1x128xf32, #tpu.memory_space<vmem>>, vector<1x128xf32>
    %52 = vector.broadcast %51 : vector<1x128xf32> to vector<8x128xf32>
    %53 = arith.addf %50, %52 : vector<8x128xf32>
    %c0_46 = arith.constant 0 : index
    %c0_47 = arith.constant 0 : index
    %54 = vector.load %arg14[%c0_46, %c0_47] : memref<8x128xf32, #tpu.memory_space<vmem>>, vector<8x128xf32>
    tpu.vector_store %arg14[%c0_46, %c0_47], %53 {strides = array<i32>} : memref<8x128xf32, #tpu.memory_space<vmem>>, vector<8x128xf32>,
    return
  }
}

</mosaic_0001>

<llo_original>
// kernel: dmpnn_forward.1
$region0: #{dmpnn_forward.1}
  #allocation0 [shape = 'u32[]', space=smem, size = 0x4, offset = 0x4, fixed_abs, tag = 'smem constant byte address 0x4 - core index']
  #allocation1 [shape = 'u32[144,128]{1,0:T(1,128)}', space=vmem, size = 0x12000, scoped, tag = 'internal scratch']
  %s0 = inlined_call_operand.hbm [shape: bf16[128,256], index: 0, kind: input, shape index: {}]
  %s1 = inlined_call_operand.hbm [shape: bf16[128,256], index: 1, kind: input, shape index: {}]
  %s2 = inlined_call_operand.hbm [shape: bf16[128,128], index: 2, kind: input, shape index: {}]
  %s3 = inlined_call_operand.hbm [shape: bf16[128,128], index: 3, kind: input, shape index: {}]
  %s4 = inlined_call_operand.vmem [shape: f32[8,128], index: 4, kind: input, shape index: {}]
  %s5 = inlined_call_operand.hbm [shape: bf16[256,128], index: 5, kind: input, shape index: {}]
  %s6 = inlined_call_operand.hbm [shape: bf16[128,128], index: 6, kind: input, shape index: {}]
  %s7 = inlined_call_operand.hbm [shape: bf16[256,128], index: 7, kind: input, shape index: {}]
  %s8 = inlined_call_operand.hbm [shape: bf16[128,128], index: 8, kind: input, shape index: {}]
  %s9 = inlined_call_operand.vmem [shape: f32[1,128], index: 9, kind: input, shape index: {}]
  %s10 = inlined_call_operand.hbm [shape: bf16[128,128], index: 10, kind: input, shape index: {}]
  %s11 = inlined_call_operand.vmem [shape: f32[1,128], index: 11, kind: input, shape index: {}]
  %s12 = inlined_call_operand.hbm [shape: bf16[128,128], index: 12, kind: input, shape index: {}]
  %s13 = inlined_call_operand.vmem [shape: f32[1,128], index: 13, kind: input, shape index: {}]
  %s14 = inlined_call_operand.vmem [shape: f32[8,128], index: 14, kind: output, shape index: {}]
  %s15 = sld [smem:[#allocation0]]
  $region106: #{dmpnn_forward.1} parent=0
    _
  %s17 = ssub.s32 1, %s15
  %s18 = scalar_select 0, %s17, %s15
  $region1: #{dmpnn_forward.1} parent=0
    #allocation2 [shape = 'u8[65536]{0}', space=vmem, size = 0x10000, scoped, tag = 'input window, operand 0, single buffered']
    #allocation3 [shape = 's32[1]{0}', space=sflag, size = 0x4, scoped, tag = 'scoped memory for dmpnn_forward.1']
    #allocation4 [shape = 'u8[65536]{0}', space=vmem, size = 0x10000, scoped, tag = 'input window, operand 1, single buffered']
    #allocation5 [shape = 's32[1]{0}', space=sflag, size = 0x4, scoped, tag = 'scoped memory for dmpnn_forward.1']
    #allocation6 [shape = 'u8[32768]{0}', space=vmem, size = 0x8000, scoped, tag = 'input window, operand 2, single buffered']
    #allocation7 [shape = 'u8[32768]{0}', space=vmem, size = 0x8000, scoped, tag = 'input window, operand 3, single buffered']
    #allocation8 [shape = 's32[1]{0}', space=sflag, size = 0x4, scoped, tag = 'scoped memory for dmpnn_forward.1']
    #allocation9 [shape = 'u8[65536]{0}', space=vmem, size = 0x10000, scoped, tag = 'input window, operand 5, single buffered']
    #allocation10 [shape = 'u8[32768]{0}', space=vmem, size = 0x8000, scoped, tag = 'input window, operand 6, single buffered']
    #allocation11 [shape = 's32[1]{0}', space=sflag, size = 0x4, scoped, tag = 'scoped memory for dmpnn_forward.1']
    #allocation12 [shape = 'u8[65536]{0}', space=vmem, size = 0x10000, scoped, tag = 'input window, operand 7, single buffered']
    #allocation13 [shape = 'u8[32768]{0}', space=vmem, size = 0x8000, scoped, tag = 'input window, operand 8, single buffered']
    #allocation14 [shape = 's32[1]{0}', space=sflag, size = 0x4, scoped, tag = 'scoped memory for dmpnn_forward.1']
    #allocation15 [shape = 'u8[32768]{0}', space=vmem, size = 0x8000, scoped, tag = 'input window, operand 10, single buffered']
    #allocation16 [shape = 'u8[32768]{0}', space=vmem, size = 0x8000, scoped, tag = 'input window, operand 12, single buffered']
    #allocation17 [shape = 's32[1]{0}', space=sflag, size = 0x4, scoped, tag = 'scoped memory for dmpnn_forward.1']
    %19 = vsyncpa [#allocation3], 0
    %20 = vsyncpa [#allocation5], 0
    %21 = vsyncpa [#allocation8], 0
    %22 = vsyncpa [#allocation11], 0
    %23 = vsyncpa [#allocation14], 0
    %24 = vsyncpa [#allocation17], 0
    // Predicated region
    $region2: #{dmpnn_forward.1} parent=1 // pred_check
      _
    $region3: #{dmpnn_forward.1} parent=1 // pred_check_branch
      %26 = sbr.rel (0) target = $region5
    $region4: #{dmpnn_forward.1} parent=1 // pred_region
      %s28 = ssub.s32 2048, 2048
      %29 = vsyncadd [#allocation3], %s28
      %s30 = sshll.u32 [#allocation2], 4
      %s31 = int_to_ptr.vmem [resolvable:$true] %s30
      %36 = dma.hbm_to_vmem [thread:$0]  %s0, 2048, %s31, [#allocation3], 128, 128, 8
    $region5: #{dmpnn_forward.1} parent=1 // pred_fallthru
      _
    // Predicated region
    $region6: #{dmpnn_forward.1} parent=1 // pred_check
      _
    $region7: #{dmpnn_forward.1} parent=1 // pred_check_branch
      %38 = sbr.rel (0) target = $region9
    $region8: #{dmpnn_forward.1} parent=1 // pred_region
      %s40 = ssub.s32 2048, 2048
      %41 = vsyncadd [#allocation5], %s40
      %s42 = sshll.u32 [#allocation4], 4
      %s43 = int_to_ptr.vmem [resolvable:$true] %s42
      %48 = dma.hbm_to_vmem [thread:$0]  %s1, 2048, %s43, [#allocation5], 128, 128, 8
    $region9: #{dmpnn_forward.1} parent=1 // pred_fallthru
      _
    // Predicated region
    $region10: #{dmpnn_forward.1} parent=1 // pred_check
      _
    $region11: #{dmpnn_forward.1} parent=1 // pred_check_branch
      %50 = sbr.rel (0) target = $region13
    $region12: #{dmpnn_forward.1} parent=1 // pred_region
      %s52 = ssub.s32 1024, 1024
      %53 = vsyncadd [#allocation5], %s52
      %s54 = sshll.u32 [#allocation6], 4
      %s55 = int_to_ptr.vmem [resolvable:$true] %s54
      %60 = dma.hbm_to_vmem [thread:$0]  %s2, 1024, %s55, [#allocation5], 64, 64, 4
    $region13: #{dmpnn_forward.1} parent=1 // pred_fallthru
      _
    // Predicated region
    $region14: #{dmpnn_forward.1} parent=1 // pred_check
      _
    $region15: #{dmpnn_forward.1} parent=1 // pred_check_branch
      %62 = sbr.rel (0) target = $region17
    $region16: #{dmpnn_forward.1} parent=1 // pred_region
      %s64 = ssub.s32 1024, 1024
      %65 = vsyncadd [#allocation8], %s64
      %s66 = sshll.u32 [#allocation7], 4
      %s67 = int_to_ptr.vmem [resolvable:$true] %s66
      %72 = dma.hbm_to_vmem [thread:$0]  %s3, 1024, %s67, [#allocation8], 64, 64, 4
    $region17: #{dmpnn_forward.1} parent=1 // pred_fallthru
      _
    // Predicated region
    $region18: #{dmpnn_forward.1} parent=1 // pred_check
      _
    $region19: #{dmpnn_forward.1} parent=1 // pred_check_branch
      %74 = sbr.rel (0) target = $region21
    $region20: #{dmpnn_forward.1} parent=1 // pred_region
      _
    $region21: #{dmpnn_forward.1} parent=1 // pred_fallthru
      _
    // Predicated region
    $region22: #{dmpnn_forward.1} parent=1 // pred_check
      _
    $region23: #{dmpnn_forward.1} parent=1 // pred_check_branch
      %76 = sbr.rel (0) target = $region25
    $region24: #{dmpnn_forward.1} parent=1 // pred_region
      %s78 = ssub.s32 2048, 2048
      %79 = vsyncadd [#allocation8], %s78
      %s80 = sshll.u32 [#allocation9], 4
      %s81 = int_to_ptr.vmem [resolvable:$true] %s80
      %86 = dma.hbm_to_vmem [thread:$0]  %s5, 2048, %s81, [#allocation8], 64, 64, 4
    $region25: #{dmpnn_forward.1} parent=1 // pred_fallthru
      _
    // Predicated region
    $region26: #{dmpnn_forward.1} parent=1 // pred_check
      _
    $region27: #{dmpnn_forward.1} parent=1 // pred_check_branch
      %88 = sbr.rel (0) target = $region29
    $region28: #{dmpnn_forward.1} parent=1 // pred_region
      %s90 = ssub.s32 1024, 1024
      %91 = vsyncadd [#allocation11], %s90
      %s92 = sshll.u32 [#allocation10], 4
      %s93 = int_to_ptr.vmem [resolvable:$true] %s92
      %98 = dma.hbm_to_vmem [thread:$0]  %s6, 1024, %s93, [#allocation11], 64, 64, 4
    $region29: #{dmpnn_forward.1} parent=1 // pred_fallthru
      _
    // Predicated region
    $region30: #{dmpnn_forward.1} parent=1 // pred_check
      _
    $region31: #{dmpnn_forward.1} parent=1 // pred_check_branch
      %100 = sbr.rel (0) target = $region33
    $region32: #{dmpnn_forward.1} parent=1 // pred_region
      %s102 = ssub.s32 2048, 2048
      %103 = vsyncadd [#allocation11], %s102
      %s104 = sshll.u32 [#allocation12], 4
      %s105 = int_to_ptr.vmem [resolvable:$true] %s104
      %110 = dma.hbm_to_vmem [thread:$0]  %s7, 2048, %s105, [#allocation11], 64, 64, 4
    $region33: #{dmpnn_forward.1} parent=1 // pred_fallthru
      _
    // Predicated region
    $region34: #{dmpnn_forward.1} parent=1 // pred_check
      _
    $region35: #{dmpnn_forward.1} parent=1 // pred_check_branch
      %112 = sbr.rel (0) target = $region37
    $region36: #{dmpnn_forward.1} parent=1 // pred_region
      %s114 = ssub.s32 1024, 1024
      %115 = vsyncadd [#allocation14], %s114
      %s116 = sshll.u32 [#allocation13], 4
      %s117 = int_to_ptr.vmem [resolvable:$true] %s116
      %122 = dma.hbm_to_vmem [thread:$0]  %s8, 1024, %s117, [#allocation14], 64, 64, 4
    $region37: #{dmpnn_forward.1} parent=1 // pred_fallthru
      _
    // Predicated region
    $region38: #{dmpnn_forward.1} parent=1 // pred_check
      _
    $region39: #{dmpnn_forward.1} parent=1 // pred_check_branch
      %124 = sbr.rel (0) target = $region41
    $region40: #{dmpnn_forward.1} parent=1 // pred_region
      _
    $region41: #{dmpnn_forward.1} parent=1 // pred_fallthru
      _
    // Predicated region
    $region42: #{dmpnn_forward.1} parent=1 // pred_check
      _
    $region43: #{dmpnn_forward.1} parent=1 // pred_check_branch
      %126 = sbr.rel (0) target = $region45
    $region44: #{dmpnn_forward.1} parent=1 // pred_region
      %s128 = ssub.s32 1024, 1024
      %129 = vsyncadd [#allocation14], %s128
      %s130 = sshll.u32 [#allocation15], 4
      %s131 = int_to_ptr.vmem [resolvable:$true] %s130
      %136 = dma.hbm_to_vmem [thread:$0]  %s10, 1024, %s131, [#allocation14], 64, 64, 4
    $region45: #{dmpnn_forward.1} parent=1 // pred_fallthru
      _
    // Predicated region
    $region46: #{dmpnn_forward.1} parent=1 // pred_check
      _
    $region47: #{dmpnn_forward.1} parent=1 // pred_check_branch
      %138 = sbr.rel (0) target = $region49
    $region48: #{dmpnn_forward.1} parent=1 // pred_region
      _
    $region49: #{dmpnn_forward.1} parent=1 // pred_fallthru
      _
    // Predicated region
    $region50: #{dmpnn_forward.1} parent=1 // pred_check
      _
    $region51: #{dmpnn_forward.1} parent=1 // pred_check_branch
      %140 = sbr.rel (0) target = $region53
    $region52: #{dmpnn_forward.1} parent=1 // pred_region
      %s142 = ssub.s32 1024, 1024
      %143 = vsyncadd [#allocation17], %s142
      %s144 = sshll.u32 [#allocation16], 4
      %s145 = int_to_ptr.vmem [resolvable:$true] %s144
      %150 = dma.hbm_to_vmem [thread:$0]  %s12, 1024, %s145, [#allocation17], 64, 64, 4
    $region53: #{dmpnn_forward.1} parent=1 // pred_fallthru
      _
    // Predicated region
    $region54: #{dmpnn_forward.1} parent=1 // pred_check
      _
    $region55: #{dmpnn_forward.1} parent=1 // pred_check_branch
      %152 = sbr.rel (0) target = $region57
    $region56: #{dmpnn_forward.1} parent=1 // pred_region
      _
    $region57: #{dmpnn_forward.1} parent=1 // pred_fallthru
      _
    // Predicated region
    $region58: #{dmpnn_forward.1} parent=1 // pred_check
      _
    $region59: #{dmpnn_forward.1} parent=1 // pred_check_branch
      %154 = sbr.rel (0) target = $region61
    $region60: #{dmpnn_forward.1} parent=1 // pred_region
      %155 = dma.done [#allocation3], 2048
    $region61: #{dmpnn_forward.1} parent=1 // pred_fallthru
      _
    // Predicated region
    $region62: #{dmpnn_forward.1} parent=1 // pred_check
      _
    $region63: #{dmpnn_forward.1} parent=1 // pred_check_branch
      %157 = sbr.rel (0) target = $region65
    $region64: #{dmpnn_forward.1} parent=1 // pred_region
      %158 = dma.done [#allocation5], 2048
    $region65: #{dmpnn_forward.1} parent=1 // pred_fallthru
      _
    // Predicated region
    $region66: #{dmpnn_forward.1} parent=1 // pred_check
      _
    $region67: #{dmpnn_forward.1} parent=1 // pred_check_branch
      %160 = sbr.rel (0) target = $region69
    $region68: #{dmpnn_forward.1} parent=1 // pred_region
      %161 = dma.done [#allocation5], 1024
    $region69: #{dmpnn_forward.1} parent=1 // pred_fallthru
      _
    // Predicated region
    $region70: #{dmpnn_forward.1} parent=1 // pred_check
      _
    $region71: #{dmpnn_forward.1} parent=1 // pred_check_branch
      %163 = sbr.rel (0) target = $region73
    $region72: #{dmpnn_forward.1} parent=1 // pred_region
      %164 = dma.done [#allocation8], 1024
    $region73: #{dmpnn_forward.1} parent=1 // pred_fallthru
      _
    // Predicated region
    $region74: #{dmpnn_forward.1} parent=1 // pred_check
      _
    $region75: #{dmpnn_forward.1} parent=1 // pred_check_branch
      %166 = sbr.rel (0) target = $region77
    $region76: #{dmpnn_forward.1} parent=1 // pred_region
      %167 = dma.done [#allocation8], 2048
    $region77: #{dmpnn_forward.1} parent=1 // pred_fallthru
      _
    // Predicated region
    $region78: #{dmpnn_forward.1} parent=1 // pred_check
      _
    $region79: #{dmpnn_forward.1} parent=1 // pred_check_branch
      %169 = sbr.rel (0) target = $region81
    $region80: #{dmpnn_forward.1} parent=1 // pred_region
      %170 = dma.done [#allocation11], 1024
    $region81: #{dmpnn_forward.1} parent=1 // pred_fallthru
      _
    // Predicated region
    $region82: #{dmpnn_forward.1} parent=1 // pred_check
      _
    $region83: #{dmpnn_forward.1} parent=1 // pred_check_branch
      %172 = sbr.rel (0) target = $region85
    $region84: #{dmpnn_forward.1} parent=1 // pred_region
      %173 = dma.done [#allocation11], 2048
    $region85: #{dmpnn_forward.1} parent=1 // pred_fallthru
      _
    // Predicated region
    $region86: #{dmpnn_forward.1} parent=1 // pred_check
      _
    $region87: #{dmpnn_forward.1} parent=1 // pred_check_branch
      %175 = sbr.rel (0) target = $region89
    $region88: #{dmpnn_forward.1} parent=1 // pred_region
      %176 = dma.done [#allocation14], 1024
    $region89: #{dmpnn_forward.1} parent=1 // pred_fallthru
      _
    // Predicated region
    $region90: #{dmpnn_forward.1} parent=1 // pred_check
      _
    $region91: #{dmpnn_forward.1} parent=1 // pred_check_branch
      %178 = sbr.rel (0) target = $region93
    $region92: #{dmpnn_forward.1} parent=1 // pred_region
      %179 = dma.done [#allocation14], 1024
    $region93: #{dmpnn_forward.1} parent=1 // pred_fallthru
      _
    // Predicated region
    $region94: #{dmpnn_forward.1} parent=1 // pred_check
      _
    $region95: #{dmpnn_forward.1} parent=1 // pred_check_branch
      %181 = sbr.rel (0) target = $region97
    $region96: #{dmpnn_forward.1} parent=1 // pred_region
      %182 = dma.done [#allocation17], 1024
    $region97: #{dmpnn_forward.1} parent=1 // pred_fallthru
      _
    %v184 = vld [vmem:[#allocation4] sm:$0xff]
    %v185 = vld [vmem:[#allocation4 + $0x8] sm:$0xff]
    %v186 = vld [vmem:[#allocation4 + $0x10] sm:$0xff]
    %v187 = vld [vmem:[#allocation4 + $0x18] sm:$0xff]
    %v188 = vld [vmem:[#allocation4 + $0x20] sm:$0xff]
    %v189 = vld [vmem:[#allocation4 + $0x28] sm:$0xff]
    %v190 = vld [vmem:[#allocation4 + $0x30] sm:$0xff]
    %v191 = vld [vmem:[#allocation4 + $0x38] sm:$0xff]
    %v192 = vld [vmem:[#allocation4 + $0x40] sm:$0xff]
    %v193 = vld [vmem:[#allocation4 + $0x48] sm:$0xff]
    %v194 = vld [vmem:[#allocation4 + $0x50] sm:$0xff]
    %v195 = vld [vmem:[#allocation4 + $0x58] sm:$0xff]
    %v196 = vld [vmem:[#allocation4 + $0x60] sm:$0xff]
    %v197 = vld [vmem:[#allocation4 + $0x68] sm:$0xff]
    %v198 = vld [vmem:[#allocation4 + $0x70] sm:$0xff]
    %v199 = vld [vmem:[#allocation4 + $0x78] sm:$0xff]
    %v200 = vld [vmem:[#allocation9] sm:$0xf]
    %v201 = vld [vmem:[#allocation9 + $0x4] sm:$0xf]
    %v202 = vld [vmem:[#allocation9 + $0x8] sm:$0xf]
    %v203 = vld [vmem:[#allocation9 + $0xc] sm:$0xf]
    %v204 = vld [vmem:[#allocation9 + $0x10] sm:$0xf]
    %v205 = vld [vmem:[#allocation9 + $0x14] sm:$0xf]
    %v206 = vld [vmem:[#allocation9 + $0x18] sm:$0xf]
    %v207 = vld [vmem:[#allocation9 + $0x1c] sm:$0xf]
    %v208 = vld [vmem:[#allocation9 + $0x20] sm:$0xf]
    %v209 = vld [vmem:[#allocation9 + $0x24] sm:$0xf]
    %v210 = vld [vmem:[#allocation9 + $0x28] sm:$0xf]
    %v211 = vld [vmem:[#allocation9 + $0x2c] sm:$0xf]
    %v212 = vld [vmem:[#allocation9 + $0x30] sm:$0xf]
    %v213 = vld [vmem:[#allocation9 + $0x34] sm:$0xf]
    %v214 = vld [vmem:[#allocation9 + $0x38] sm:$0xf]
    %v215 = vld [vmem:[#allocation9 + $0x3c] sm:$0xf]
    %v216 = vld [vmem:[#allocation9 + $0x40] sm:$0xf]
    %v217 = vld [vmem:[#allocation9 + $0x44] sm:$0xf]
    %v218 = vld [vmem:[#allocation9 + $0x48] sm:$0xf]
    %v219 = vld [vmem:[#allocation9 + $0x4c] sm:$0xf]
    %v220 = vld [vmem:[#allocation9 + $0x50] sm:$0xf]
    %v221 = vld [vmem:[#allocation9 + $0x54] sm:$0xf]
    %v222 = vld [vmem:[#allocation9 + $0x58] sm:$0xf]
    %v223 = vld [vmem:[#allocation9 + $0x5c] sm:$0xf]
    %v224 = vld [vmem:[#allocation9 + $0x60] sm:$0xf]
    %v225 = vld [vmem:[#allocation9 + $0x64] sm:$0xf]
    %v226 = vld [vmem:[#allocation9 + $0x68] sm:$0xf]
    %v227 = vld [vmem:[#allocation9 + $0x6c] sm:$0xf]
    %v228 = vld [vmem:[#allocation9 + $0x70] sm:$0xf]
    %v229 = vld [vmem:[#allocation9 + $0x74] sm:$0xf]
    %v230 = vld [vmem:[#allocation9 + $0x78] sm:$0xf]
    %v231 = vld [vmem:[#allocation9 + $0x7c] sm:$0xf]
    %v248 = vunpack.c.l.b16 %v184
    %v249 = vunpack.c.h.b16 %v184
    %v250 = vunpack.c.l.b16 %v185
    %v251 = vunpack.c.h.b16 %v185
    %v252 = vunpack.c.l.b16 %v186
    %v253 = vunpack.c.h.b16 %v186
    %v254 = vunpack.c.l.b16 %v187
    %v255 = vunpack.c.h.b16 %v187
    %v256 = vunpack.c.l.b16 %v188
    %v257 = vunpack.c.h.b16 %v188
    %v258 = vunpack.c.l.b16 %v189
    %v259 = vunpack.c.h.b16 %v189
    %v260 = vunpack.c.l.b16 %v190
    %v261 = vunpack.c.h.b16 %v190
    %v262 = vunpack.c.l.b16 %v191
    %v263 = vunpack.c.h.b16 %v191
    %v264 = vunpack.c.l.b16 %v192
    %v265 = vunpack.c.h.b16 %v192
    %v266 = vunpack.c.l.b16 %v193
    %v267 = vunpack.c.h.b16 %v193
    %v268 = vunpack.c.l.b16 %v194
    %v269 = vunpack.c.h.b16 %v194
    %v270 = vunpack.c.l.b16 %v195
    %v271 = vunpack.c.h.b16 %v195
    %v272 = vunpack.c.l.b16 %v196
    %v273 = vunpack.c.h.b16 %v196
    %v274 = vunpack.c.l.b16 %v197
    %v275 = vunpack.c.h.b16 %v197
    %v276 = vunpack.c.l.b16 %v198
    %v277 = vunpack.c.h.b16 %v198
    %v278 = vunpack.c.l.b16 %v199
    %v279 = vunpack.c.h.b16 %v199
    %v280 = vpack.c.b16 %v250, %v248
    %v281 = vpack.c.b16 %v251, %v249
    %v282 = vpack.c.b16 %v254, %v252
    %v283 = vpack.c.b16 %v255, %v253
    %v284 = vpack.c.b16 %v258, %v256
    %v285 = vpack.c.b16 %v259, %v257
    %v286 = vpack.c.b16 %v262, %v260
    %v287 = vpack.c.b16 %v263, %v261
    %v288 = vpack.c.b16 %v266, %v264
    %v289 = vpack.c.b16 %v267, %v265
    %v290 = vpack.c.b16 %v270, %v268
    %v291 = vpack.c.b16 %v271, %v269
    %v292 = vpack.c.b16 %v274, %v272
    %v293 = vpack.c.b16 %v275, %v273
    %v294 = vpack.c.b16 %v278, %v276
    %v295 = vpack.c.b16 %v279, %v277
    %v344 = vunpack.c.l.b16 %v200
    %v345 = vunpack.c.l.b16 %v201
    %v346 = vunpack.c.l.b16 %v202
    %v347 = vunpack.c.l.b16 %v203
    %v348 = vunpack.c.l.b16 %v204
    %v349 = vunpack.c.l.b16 %v205
    %v350 = vunpack.c.l.b16 %v206
    %v351 = vunpack.c.l.b16 %v207
    %v352 = vunpack.c.l.b16 %v208
    %v353 = vunpack.c.l.b16 %v209
    %v354 = vunpack.c.l.b16 %v210
    %v355 = vunpack.c.l.b16 %v211
    %v356 = vunpack.c.l.b16 %v212
    %v357 = vunpack.c.l.b16 %v213
    %v358 = vunpack.c.l.b16 %v214
    %v359 = vunpack.c.l.b16 %v215
    %v360 = vunpack.c.l.b16 %v216
    %v361 = vunpack.c.l.b16 %v217
    %v362 = vunpack.c.l.b16 %v218
    %v363 = vunpack.c.l.b16 %v219
    %v364 = vunpack.c.l.b16 %v220
    %v365 = vunpack.c.l.b16 %v221
    %v366 = vunpack.c.l.b16 %v222
    %v367 = vunpack.c.l.b16 %v223
    %v368 = vunpack.c.l.b16 %v224
    %v369 = vunpack.c.l.b16 %v225
    %v370 = vunpack.c.l.b16 %v226
    %v371 = vunpack.c.l.b16 %v227
    %v372 = vunpack.c.l.b16 %v228
    %v373 = vunpack.c.l.b16 %v229
    %v374 = vunpack.c.l.b16 %v230
    %v375 = vunpack.c.l.b16 %v231
    %v376 = vpack.c.b16 %v345, %v344
    %v377 = vpack.c.b16 %v347, %v346
    %v378 = vpack.c.b16 %v349, %v348
    %v379 = vpack.c.b16 %v351, %v350
    %v380 = vpack.c.b16 %v353, %v352
    %v381 = vpack.c.b16 %v355, %v354
    %v382 = vpack.c.b16 %v357, %v356
    %v383 = vpack.c.b16 %v359, %v358
    %v384 = vpack.c.b16 %v361, %v360
    %v385 = vpack.c.b16 %v363, %v362
    %v386 = vpack.c.b16 %v365, %v364
    %v387 = vpack.c.b16 %v367, %v366
    %v388 = vpack.c.b16 %v369, %v368
    %v389 = vpack.c.b16 %v371, %v370
    %v390 = vpack.c.b16 %v373, %v372
    %v391 = vpack.c.b16 %v375, %v374
    %408 = vmatprep.subr.bf16.mxu0 0
    %409 = vmatpush1.bf16.msra.mxu0 %v376
    %410 = vmatprep.subr.bf16.mxu0 0
    %411 = vmatpush1.bf16.msra.mxu0 %v377
    %412 = vmatprep.subr.bf16.mxu0 0
    %413 = vmatpush1.bf16.msra.mxu0 %v378
    %414 = vmatprep.subr.bf16.mxu0 0
    %415 = vmatpush1.bf16.msra.mxu0 %v379
    %416 = vmatprep.subr.bf16.mxu0 0
    %417 = vmatpush1.bf16.msra.mxu0 %v380
    %418 = vmatprep.subr.bf16.mxu0 0
    %419 = vmatpush1.bf16.msra.mxu0 %v381
    %420 = vmatprep.subr.bf16.mxu0 0
    %421 = vmatpush1.bf16.msra.mxu0 %v382
    %422 = vmatprep.subr.bf16.mxu0 0
    %423 = vmatpush1.bf16.msra.mxu0 %v383
    %424 = vmatprep.subr.bf16.mxu0 0
    %425 = vmatpush1.bf16.msra.mxu0 %v384
    %426 = vmatprep.subr.bf16.mxu0 0
    %427 = vmatpush1.bf16.msra.mxu0 %v385
    %428 = vmatprep.subr.bf16.mxu0 0
    %429 = vmatpush1.bf16.msra.mxu0 %v386
    %430 = vmatprep.subr.bf16.mxu0 0
    %431 = vmatpush1.bf16.msra.mxu0 %v387
    %432 = vmatprep.subr.bf16.mxu0 0
    %433 = vmatpush1.bf16.msra.mxu0 %v388
    %434 = vmatprep.subr.bf16.mxu0 0
    %435 = vmatpush1.bf16.msra.mxu0 %v389
    %436 = vmatprep.subr.bf16.mxu0 0
    %437 = vmatpush1.bf16.msra.mxu0 %v390
    %438 = vmatprep.subr.bf16.mxu0 0
    %439 = vmatpush1.bf16.msra.mxu0 %v391
    %440 = vmatprep.mubr.bf16.mxu0 %v281
    %441 = vmatmul.mubr.bf16.gmra.mrb[0].mxu0 %v280
    %v442 = vpop.f32.mrb[0].mxu0
    %v443 = vadd.f32 0.0, %v442
    %v444 = vpop.f32.mrb[0].mxu0
    %v445 = vpop.f32.mrb[0].mxu0
    %v446 = vadd.f32 0.0, %v445
    %v447 = vpop.f32.mrb[0].mxu0
    %448 = vmatprep.mubr.bf16.mxu0 %v283
    %449 = vmatmul.mubr.bf16.gmra.mrb[0].mxu0 %v282
    %v450 = vpop.f32.mrb[0].mxu0
    %v451 = vadd.f32 0.0, %v450
    %v452 = vpop.f32.mrb[0].mxu0
    %v453 = vpop.f32.mrb[0].mxu0
    %v454 = vadd.f32 0.0, %v453
    %v455 = vpop.f32.mrb[0].mxu0
    %456 = vmatprep.mubr.bf16.mxu0 %v285
    %457 = vmatmul.mubr.bf16.gmra.mrb[0].mxu0 %v284
    %v458 = vpop.f32.mrb[0].mxu0
    %v459 = vadd.f32 0.0, %v458
    %v460 = vpop.f32.mrb[0].mxu0
    %v461 = vpop.f32.mrb[0].mxu0
    %v462 = vadd.f32 0.0, %v461
    %v463 = vpop.f32.mrb[0].mxu0
    %464 = vmatprep.mubr.bf16.mxu0 %v287
    %465 = vmatmul.mubr.bf16.gmra.mrb[0].mxu0 %v286
    %v466 = vpop.f32.mrb[0].mxu0
    %v467 = vadd.f32 0.0, %v466
    %v468 = vpop.f32.mrb[0].mxu0
    %v469 = vpop.f32.mrb[0].mxu0
    %v470 = vadd.f32 0.0, %v469
    %v471 = vpop.f32.mrb[0].mxu0
    %472 = vmatprep.mubr.bf16.mxu0 %v289
    %473 = vmatmul.mubr.bf16.gmra.mrb[0].mxu0 %v288
    %v474 = vpop.f32.mrb[0].mxu0
    %v475 = vadd.f32 0.0, %v474
    %v476 = vpop.f32.mrb[0].mxu0
    %v477 = vpop.f32.mrb[0].mxu0
    %v478 = vadd.f32 0.0, %v477
    %v479 = vpop.f32.mrb[0].mxu0
    %480 = vmatprep.mubr.bf16.mxu0 %v291
    %481 = vmatmul.mubr.bf16.gmra.mrb[0].mxu0 %v290
    %v482 = vpop.f32.mrb[0].mxu0
    %v483 = vadd.f32 0.0, %v482
    %v484 = vpop.f32.mrb[0].mxu0
    %v485 = vpop.f32.mrb[0].mxu0
    %v486 = vadd.f32 0.0, %v485
    %v487 = vpop.f32.mrb[0].mxu0
    %488 = vmatprep.mubr.bf16.mxu0 %v293
    %489 = vmatmul.mubr.bf16.gmra.mrb[0].mxu0 %v292
    %v490 = vpop.f32.mrb[0].mxu0
    %v491 = vadd.f32 0.0, %v490
    %v492 = vpop.f32.mrb[0].mxu0
    %v493 = vpop.f32.mrb[0].mxu0
    %v494 = vadd.f32 0.0, %v493
    %v495 = vpop.f32.mrb[0].mxu0
    %496 = vmatprep.mubr.bf16.mxu0 %v295
    %497 = vmatmul.mubr.bf16.gmra.mrb[0].mxu0 %v294
    %v498 = vpop.f32.mrb[0].mxu0
    %v499 = vadd.f32 0.0, %v498
    %v500 = vpop.f32.mrb[0].mxu0
    %v501 = vpop.f32.mrb[0].mxu0
    %v502 = vadd.f32 0.0, %v501
    %v503 = vpop.f32.mrb[0].mxu0
    %504 = vdwg.mxu0
    %v505 = vmax.f32 %v443, 0.0
    %v506 = vmax.f32 %v446, 0.0
    %v507 = vmax.f32 %v451, 0.0
    %v508 = vmax.f32 %v454, 0.0
    %v509 = vmax.f32 %v459, 0.0
    %v510 = vmax.f32 %v462, 0.0
    %v511 = vmax.f32 %v467, 0.0
    %v512 = vmax.f32 %v470, 0.0
    %v513 = vmax.f32 %v475, 0.0
    %v514 = vmax.f32 %v478, 0.0
    %v515 = vmax.f32 %v483, 0.0
    %v516 = vmax.f32 %v486, 0.0
    %v517 = vmax.f32 %v491, 0.0
    %v518 = vmax.f32 %v494, 0.0
    %v519 = vmax.f32 %v499, 0.0
    %v520 = vmax.f32 %v502, 0.0
    %v521 = vpack.c.bf16 %v506, %v505
    %v522 = vpack.c.bf16 %v508, %v507
    %v523 = vpack.c.bf16 %v510, %v509
    %v524 = vpack.c.bf16 %v512, %v511
    %v525 = vpack.c.bf16 %v514, %v513
    %v526 = vpack.c.bf16 %v516, %v515
    %v527 = vpack.c.bf16 %v518, %v517
    %v528 = vpack.c.bf16 %v520, %v519
    %v529 = vld [vmem:[#allocation6] sm:$0xf]
    %v530 = vld [vmem:[#allocation6 + $0x4] sm:$0xf]
    %v531 = vld [vmem:[#allocation6 + $0x8] sm:$0xf]
    %v532 = vld [vmem:[#allocation6 + $0xc] sm:$0xf]
    %v533 = vld [vmem:[#allocation6 + $0x10] sm:$0xf]
    %v534 = vld [vmem:[#allocation6 + $0x14] sm:$0xf]
    %v535 = vld [vmem:[#allocation6 + $0x18] sm:$0xf]
    %v536 = vld [vmem:[#allocation6 + $0x1c] sm:$0xf]
    %v537 = vld [vmem:[#allocation6 + $0x20] sm:$0xf]
    %v538 = vld [vmem:[#allocation6 + $0x24] sm:$0xf]
    %v539 = vld [vmem:[#allocation6 + $0x28] sm:$0xf]
    %v540 = vld [vmem:[#allocation6 + $0x2c] sm:$0xf]
    %v541 = vld [vmem:[#allocation6 + $0x30] sm:$0xf]
    %v542 = vld [vmem:[#allocation6 + $0x34] sm:$0xf]
    %v543 = vld [vmem:[#allocation6 + $0x38] sm:$0xf]
    %v544 = vld [vmem:[#allocation6 + $0x3c] sm:$0xf]
    %v561 = vunpack.c.l.b16 %v529
    %v562 = vunpack.c.l.b16 %v530
    %v563 = vunpack.c.l.b16 %v531
    %v564 = vunpack.c.l.b16 %v532
    %v565 = vunpack.c.l.b16 %v533
    %v566 = vunpack.c.l.b16 %v534
    %v567 = vunpack.c.l.b16 %v535
    %v568 = vunpack.c.l.b16 %v536
    %v569 = vunpack.c.l.b16 %v537
    %v570 = vunpack.c.l.b16 %v538
    %v571 = vunpack.c.l.b16 %v539
    %v572 = vunpack.c.l.b16 %v540
    %v573 = vunpack.c.l.b16 %v541
    %v574 = vunpack.c.l.b16 %v542
    %v575 = vunpack.c.l.b16 %v543
    %v576 = vunpack.c.l.b16 %v544
    %v577 = vpack.c.b16 %v562, %v561
    %v578 = vpack.c.b16 %v564, %v563
    %v579 = vpack.c.b16 %v566, %v565
    %v580 = vpack.c.b16 %v568, %v567
    %v581 = vpack.c.b16 %v570, %v569
    %v582 = vpack.c.b16 %v572, %v571
    %v583 = vpack.c.b16 %v574, %v573
    %v584 = vpack.c.b16 %v576, %v575
    %593 = vmatprep.subr.bf16.mxu0 0
    %594 = vmatpush1.bf16.msra.mxu0 %v521
    %595 = vmatprep.subr.bf16.mxu0 0
    %596 = vmatpush1.bf16.msra.mxu0 %v522
    %597 = vmatprep.subr.bf16.mxu0 0
    %598 = vmatpush1.bf16.msra.mxu0 %v523
    %599 = vmatprep.subr.bf16.mxu0 0
    %600 = vmatpush1.bf16.msra.mxu0 %v524
    %601 = vmatprep.subr.bf16.mxu0 0
    %602 = vmatpush1.bf16.msra.mxu0 %v525
    %603 = vmatprep.subr.bf16.mxu0 0
    %604 = vmatpush1.bf16.msra.mxu0 %v526
    %605 = vmatprep.subr.bf16.mxu0 0
    %606 = vmatpush1.bf16.msra.mxu0 %v527
    %607 = vmatprep.subr.bf16.mxu0 0
    %608 = vmatpush1.bf16.msra.mxu0 %v528
    %609 = vmatprep.subr.bf16.mxu0 0
    %610 = vmatpush1.bf16.msra.mxu0 0
    %611 = vmatprep.subr.bf16.mxu0 0
    %612 = vmatpush1.bf16.msra.mxu0 0
    %613 = vmatprep.subr.bf16.mxu0 0
    %614 = vmatpush1.bf16.msra.mxu0 0
    %615 = vmatprep.subr.bf16.mxu0 0
    %616 = vmatpush1.bf16.msra.mxu0 0
    %617 = vmatprep.subr.bf16.mxu0 0
    %618 = vmatpush1.bf16.msra.mxu0 0
    %619 = vmatprep.subr.bf16.mxu0 0
    %620 = vmatpush1.bf16.msra.mxu0 0
    %621 = vmatprep.subr.bf16.mxu0 0
    %622 = vmatpush1.bf16.msra.mxu0 0
    %623 = vmatprep.subr.bf16.mxu0 0
    %624 = vmatpush1.bf16.msra.mxu0 0
    %625 = vmatprep.mubr.bf16.mxu0 0
    %626 = vmatmul.mubr.bf16.gmra.mrb[0].mxu0 %v577
    %v627 = vpop.f32.mrb[0].mxu0
    %v628 = vadd.f32 0.0, %v627
    %v629 = vpop.f32.mrb[0].mxu0
    %v630 = vpop.f32.mrb[0].mxu0
    %v631 = vadd.f32 0.0, %v630
    %v632 = vpop.f32.mrb[0].mxu0
    %633 = vmatprep.mubr.bf16.mxu0 0
    %634 = vmatmul.mubr.bf16.gmra.mrb[0].mxu0 %v578
    %v635 = vpop.f32.mrb[0].mxu0
    %v636 = vadd.f32 0.0, %v635
    %v637 = vpop.f32.mrb[0].mxu0
    %v638 = vpop.f32.mrb[0].mxu0
    %v639 = vadd.f32 0.0, %v638
    %v640 = vpop.f32.mrb[0].mxu0
    %641 = vmatprep.mubr.bf16.mxu0 0
    %642 = vmatmul.mubr.bf16.gmra.mrb[0].mxu0 %v579
    %v643 = vpop.f32.mrb[0].mxu0
    %v644 = vadd.f32 0.0, %v643
    %v645 = vpop.f32.mrb[0].mxu0
    %v646 = vpop.f32.mrb[0].mxu0
    %v647 = vadd.f32 0.0, %v646
    %v648 = vpop.f32.mrb[0].mxu0
    %649 = vmatprep.mubr.bf16.mxu0 0
    %650 = vmatmul.mubr.bf16.gmra.mrb[0].mxu0 %v580
    %v651 = vpop.f32.mrb[0].mxu0
    %v652 = vadd.f32 0.0, %v651
    %v653 = vpop.f32.mrb[0].mxu0
    %v654 = vpop.f32.mrb[0].mxu0
    %v655 = vadd.f32 0.0, %v654
    %v656 = vpop.f32.mrb[0].mxu0
    %657 = vmatprep.mubr.bf16.mxu0 0
    %658 = vmatmul.mubr.bf16.gmra.mrb[0].mxu0 %v581
    %v659 = vpop.f32.mrb[0].mxu0
    %v660 = vadd.f32 0.0, %v659
    %v661 = vpop.f32.mrb[0].mxu0
    %v662 = vpop.f32.mrb[0].mxu0
    %v663 = vadd.f32 0.0, %v662
    %v664 = vpop.f32.mrb[0].mxu0
    %665 = vmatprep.mubr.bf16.mxu0 0
    %666 = vmatmul.mubr.bf16.gmra.mrb[0].mxu0 %v582
    %v667 = vpop.f32.mrb[0].mxu0
    %v668 = vadd.f32 0.0, %v667
    %v669 = vpop.f32.mrb[0].mxu0
    %v670 = vpop.f32.mrb[0].mxu0
    %v671 = vadd.f32 0.0, %v670
    %v672 = vpop.f32.mrb[0].mxu0
    %673 = vmatprep.mubr.bf16.mxu0 0
    %674 = vmatmul.mubr.bf16.gmra.mrb[0].mxu0 %v583
    %v675 = vpop.f32.mrb[0].mxu0
    %v676 = vadd.f32 0.0, %v675
    %v677 = vpop.f32.mrb[0].mxu0
    %v678 = vpop.f32.mrb[0].mxu0
    %v679 = vadd.f32 0.0, %v678
    %v680 = vpop.f32.mrb[0].mxu0
    %681 = vmatprep.mubr.bf16.mxu0 0
    %682 = vmatmul.mubr.bf16.gmra.mrb[0].mxu0 %v584
    %v683 = vpop.f32.mrb[0].mxu0
    %v684 = vadd.f32 0.0, %v683
    %v685 = vpop.f32.mrb[0].mxu0
    %v686 = vpop.f32.mrb[0].mxu0
    %v687 = vadd.f32 0.0, %v686
    %v688 = vpop.f32.mrb[0].mxu0
    %689 = vdwg.mxu0
    %v690 = vpack.c.bf16 %v631, %v628
    %v691 = vpack.c.bf16 %v639, %v636
    %v692 = vpack.c.bf16 %v647, %v644
    %v693 = vpack.c.bf16 %v655, %v652
    %v694 = vpack.c.bf16 %v663, %v660
    %v695 = vpack.c.bf16 %v671, %v668
    %v696 = vpack.c.bf16 %v679, %v676
    %v697 = vpack.c.bf16 %v687, %v684
    %v698 = vld [vmem:[#allocation10] sm:$0xf]
    %v699 = vld [vmem:[#allocation10 + $0x4] sm:$0xf]
    %v700 = vld [vmem:[#allocation10 + $0x8] sm:$0xf]
    %v701 = vld [vmem:[#allocation10 + $0xc] sm:$0xf]
    %v702 = vld [vmem:[#allocation10 + $0x10] sm:$0xf]
    %v703 = vld [vmem:[#allocation10 + $0x14] sm:$0xf]
    %v704 = vld [vmem:[#allocation10 + $0x18] sm:$0xf]
    %v705 = vld [vmem:[#allocation10 + $0x1c] sm:$0xf]
    %v706 = vld [vmem:[#allocation10 + $0x20] sm:$0xf]
    %v707 = vld [vmem:[#allocation10 + $0x24] sm:$0xf]
    %v708 = vld [vmem:[#allocation10 + $0x28] sm:$0xf]
    %v709 = vld [vmem:[#allocation10 + $0x2c] sm:$0xf]
    %v710 = vld [vmem:[#allocation10 + $0x30] sm:$0xf]
    %v711 = vld [vmem:[#allocation10 + $0x34] sm:$0xf]
    %v712 = vld [vmem:[#allocation10 + $0x38] sm:$0xf]
    %v713 = vld [vmem:[#allocation10 + $0x3c] sm:$0xf]
    %v730 = vunpack.c.l.b16 %v698
    %v731 = vunpack.c.l.b16 %v699
    %v732 = vunpack.c.l.b16 %v700
    %v733 = vunpack.c.l.b16 %v701
    %v734 = vunpack.c.l.b16 %v702
    %v735 = vunpack.c.l.b16 %v703
    %v736 = vunpack.c.l.b16 %v704
    %v737 = vunpack.c.l.b16 %v705
    %v738 = vunpack.c.l.b16 %v706
    %v739 = vunpack.c.l.b16 %v707
    %v740 = vunpack.c.l.b16 %v708
    %v741 = vunpack.c.l.b16 %v709
    %v742 = vunpack.c.l.b16 %v710
    %v743 = vunpack.c.l.b16 %v711
    %v744 = vunpack.c.l.b16 %v712
    %v745 = vunpack.c.l.b16 %v713
    %v746 = vpack.c.b16 %v731, %v730
    %v747 = vpack.c.b16 %v733, %v732
    %v748 = vpack.c.b16 %v735, %v734
    %v749 = vpack.c.b16 %v737, %v736
    %v750 = vpack.c.b16 %v739, %v738
    %v751 = vpack.c.b16 %v741, %v740
    %v752 = vpack.c.b16 %v743, %v742
    %v753 = vpack.c.b16 %v745, %v744
    %762 = vmatprep.subr.bf16.mxu0 0
    %763 = vmatpush1.bf16.msra.mxu0 %v746
    %764 = vmatprep.subr.bf16.mxu0 0
    %765 = vmatpush1.bf16.msra.mxu0 %v747
    %766 = vmatprep.subr.bf16.mxu0 0
    %767 = vmatpush1.bf16.msra.mxu0 %v748
    %768 = vmatprep.subr.bf16.mxu0 0
    %769 = vmatpush1.bf16.msra.mxu0 %v749
    %770 = vmatprep.subr.bf16.mxu0 0
    %771 = vmatpush1.bf16.msra.mxu0 %v750
    %772 = vmatprep.subr.bf16.mxu0 0
    %773 = vmatpush1.bf16.msra.mxu0 %v751
    %774 = vmatprep.subr.bf16.mxu0 0
    %775 = vmatpush1.bf16.msra.mxu0 %v752
    %776 = vmatprep.subr.bf16.mxu0 0
    %777 = vmatpush1.bf16.msra.mxu0 %v753
    %778 = vmatprep.subr.bf16.mxu0 0
    %779 = vmatpush1.bf16.msra.mxu0 0
    %780 = vmatprep.subr.bf16.mxu0 0
    %781 = vmatpush1.bf16.msra.mxu0 0
    %782 = vmatprep.subr.bf16.mxu0 0
    %783 = vmatpush1.bf16.msra.mxu0 0
    %784 = vmatprep.subr.bf16.mxu0 0
    %785 = vmatpush1.bf16.msra.mxu0 0
    %786 = vmatprep.subr.bf16.mxu0 0
    %787 = vmatpush1.bf16.msra.mxu0 0
    %788 = vmatprep.subr.bf16.mxu0 0
    %789 = vmatpush1.bf16.msra.mxu0 0
    %790 = vmatprep.subr.bf16.mxu0 0
    %791 = vmatpush1.bf16.msra.mxu0 0
    %792 = vmatprep.subr.bf16.mxu0 0
    %793 = vmatpush1.bf16.msra.mxu0 0
    %794 = vmatprep.mubr.bf16.mxu0 0
    %795 = vmatmul.mubr.bf16.gmra.mrb[0].mxu0 %v690
    %v796 = vpop.f32.mrb[0].mxu0
    %v797 = vadd.f32 0.0, %v796
    %v798 = vpop.f32.mrb[0].mxu0
    %v799 = vpop.f32.mrb[0].mxu0
    %v800 = vadd.f32 0.0, %v799
    %v801 = vpop.f32.mrb[0].mxu0
    %802 = vmatprep.mubr.bf16.mxu0 0
    %803 = vmatmul.mubr.bf16.gmra.mrb[0].mxu0 %v691
    %v804 = vpop.f32.mrb[0].mxu0
    %v805 = vadd.f32 0.0, %v804
    %v806 = vpop.f32.mrb[0].mxu0
    %v807 = vpop.f32.mrb[0].mxu0
    %v808 = vadd.f32 0.0, %v807
    %v809 = vpop.f32.mrb[0].mxu0
    %810 = vmatprep.mubr.bf16.mxu0 0
    %811 = vmatmul.mubr.bf16.gmra.mrb[0].mxu0 %v692
    %v812 = vpop.f32.mrb[0].mxu0
    %v813 = vadd.f32 0.0, %v812
    %v814 = vpop.f32.mrb[0].mxu0
    %v815 = vpop.f32.mrb[0].mxu0
    %v816 = vadd.f32 0.0, %v815
    %v817 = vpop.f32.mrb[0].mxu0
    %818 = vmatprep.mubr.bf16.mxu0 0
    %819 = vmatmul.mubr.bf16.gmra.mrb[0].mxu0 %v693
    %v820 = vpop.f32.mrb[0].mxu0
    %v821 = vadd.f32 0.0, %v820
    %v822 = vpop.f32.mrb[0].mxu0
    %v823 = vpop.f32.mrb[0].mxu0
    %v824 = vadd.f32 0.0, %v823
    %v825 = vpop.f32.mrb[0].mxu0
    %826 = vmatprep.mubr.bf16.mxu0 0
    %827 = vmatmul.mubr.bf16.gmra.mrb[0].mxu0 %v694
    %v828 = vpop.f32.mrb[0].mxu0
    %v829 = vadd.f32 0.0, %v828
    %v830 = vpop.f32.mrb[0].mxu0
    %v831 = vpop.f32.mrb[0].mxu0
    %v832 = vadd.f32 0.0, %v831
    %v833 = vpop.f32.mrb[0].mxu0
    %834 = vmatprep.mubr.bf16.mxu0 0
    %835 = vmatmul.mubr.bf16.gmra.mrb[0].mxu0 %v695
    %v836 = vpop.f32.mrb[0].mxu0
    %v837 = vadd.f32 0.0, %v836
    %v838 = vpop.f32.mrb[0].mxu0
    %v839 = vpop.f32.mrb[0].mxu0
    %v840 = vadd.f32 0.0, %v839
    %v841 = vpop.f32.mrb[0].mxu0
    %842 = vmatprep.mubr.bf16.mxu0 0
    %843 = vmatmul.mubr.bf16.gmra.mrb[0].mxu0 %v696
    %v844 = vpop.f32.mrb[0].mxu0
    %v845 = vadd.f32 0.0, %v844
    %v846 = vpop.f32.mrb[0].mxu0
    %v847 = vpop.f32.mrb[0].mxu0
    %v848 = vadd.f32 0.0, %v847
    %v849 = vpop.f32.mrb[0].mxu0
    %850 = vmatprep.mubr.bf16.mxu0 0
    %851 = vmatmul.mubr.bf16.gmra.mrb[0].mxu0 %v697
    %v852 = vpop.f32.mrb[0].mxu0
    %v853 = vadd.f32 0.0, %v852
    %v854 = vpop.f32.mrb[0].mxu0
    %v855 = vpop.f32.mrb[0].mxu0
    %v856 = vadd.f32 0.0, %v855
    %v857 = vpop.f32.mrb[0].mxu0
    %858 = vdwg.mxu0
    %v859 = vadd.f32 %v443, %v797
    %v860 = vadd.f32 %v446, %v800
    %v861 = vadd.f32 %v451, %v805
    %v862 = vadd.f32 %v454, %v808
    %v863 = vadd.f32 %v459, %v813
    %v864 = vadd.f32 %v462, %v816
    %v865 = vadd.f32 %v467, %v821
    %v866 = vadd.f32 %v470, %v824
    %v867 = vadd.f32 %v475, %v829
    %v868 = vadd.f32 %v478, %v832
    %v869 = vadd.f32 %v483, %v837
    %v870 = vadd.f32 %v486, %v840
    %v871 = vadd.f32 %v491, %v845
    %v872 = vadd.f32 %v494, %v848
    %v873 = vadd.f32 %v499, %v853
    %v874 = vadd.f32 %v502, %v856
    %v875 = vmax.f32 %v859, 0.0
    %v876 = vmax.f32 %v860, 0.0
    %v877 = vmax.f32 %v861, 0.0
    %v878 = vmax.f32 %v862, 0.0
    %v879 = vmax.f32 %v863, 0.0
    %v880 = vmax.f32 %v864, 0.0
    %v881 = vmax.f32 %v865, 0.0
    %v882 = vmax.f32 %v866, 0.0
    %v883 = vmax.f32 %v867, 0.0
    %v884 = vmax.f32 %v868, 0.0
    %v885 = vmax.f32 %v869, 0.0
    %v886 = vmax.f32 %v870, 0.0
    %v887 = vmax.f32 %v871, 0.0
    %v888 = vmax.f32 %v872, 0.0
    %v889 = vmax.f32 %v873, 0.0
    %v890 = vmax.f32 %v874, 0.0
    %v891 = vpack.c.bf16 %v876, %v875
    %v892 = vpack.c.bf16 %v878, %v877
    %v893 = vpack.c.bf16 %v880, %v879
    %v894 = vpack.c.bf16 %v882, %v881
    %v895 = vpack.c.bf16 %v884, %v883
    %v896 = vpack.c.bf16 %v886, %v885
    %v897 = vpack.c.bf16 %v888, %v887
    %v898 = vpack.c.bf16 %v890, %v889
    %899 = vmatprep.subr.bf16.mxu0 0
    %900 = vmatpush1.bf16.msra.mxu0 %v891
    %901 = vmatprep.subr.bf16.mxu0 0
    %902 = vmatpush1.bf16.msra.mxu0 %v892
    %903 = vmatprep.subr.bf16.mxu0 0
    %904 = vmatpush1.bf16.msra.mxu0 %v893
    %905 = vmatprep.subr.bf16.mxu0 0
    %906 = vmatpush1.bf16.msra.mxu0 %v894
    %907 = vmatprep.subr.bf16.mxu0 0
    %908 = vmatpush1.bf16.msra.mxu0 %v895
    %909 = vmatprep.subr.bf16.mxu0 0
    %910 = vmatpush1.bf16.msra.mxu0 %v896
    %911 = vmatprep.subr.bf16.mxu0 0
    %912 = vmatpush1.bf16.msra.mxu0 %v897
    %913 = vmatprep.subr.bf16.mxu0 0
    %914 = vmatpush1.bf16.msra.mxu0 %v898
    %915 = vmatprep.subr.bf16.mxu0 0
    %916 = vmatpush1.bf16.msra.mxu0 0
    %917 = vmatprep.subr.bf16.mxu0 0
    %918 = vmatpush1.bf16.msra.mxu0 0
    %919 = vmatprep.subr.bf16.mxu0 0
    %920 = vmatpush1.bf16.msra.mxu0 0
    %921 = vmatprep.subr.bf16.mxu0 0
    %922 = vmatpush1.bf16.msra.mxu0 0
    %923 = vmatprep.subr.bf16.mxu0 0
    %924 = vmatpush1.bf16.msra.mxu0 0
    %925 = vmatprep.subr.bf16.mxu0 0
    %926 = vmatpush1.bf16.msra.mxu0 0
    %927 = vmatprep.subr.bf16.mxu0 0
    %928 = vmatpush1.bf16.msra.mxu0 0
    %929 = vmatprep.subr.bf16.mxu0 0
    %930 = vmatpush1.bf16.msra.mxu0 0
    %931 = vmatprep.mubr.bf16.mxu0 0
    %932 = vmatmul.mubr.bf16.gmra.mrb[0].mxu0 %v577
    %v933 = vpop.f32.mrb[0].mxu0
    %v934 = vadd.f32 0.0, %v933
    %v935 = vpop.f32.mrb[0].mxu0
    %v936 = vpop.f32.mrb[0].mxu0
    %v937 = vadd.f32 0.0, %v936
    %v938 = vpop.f32.mrb[0].mxu0
    %939 = vmatprep.mubr.bf16.mxu0 0
    %940 = vmatmul.mubr.bf16.gmra.mrb[0].mxu0 %v578
    %v941 = vpop.f32.mrb[0].mxu0
    %v942 = vadd.f32 0.0, %v941
    %v943 = vpop.f32.mrb[0].mxu0
    %v944 = vpop.f32.mrb[0].mxu0
    %v945 = vadd.f32 0.0, %v944
    %v946 = vpop.f32.mrb[0].mxu0
    %947 = vmatprep.mubr.bf16.mxu0 0
    %948 = vmatmul.mubr.bf16.gmra.mrb[0].mxu0 %v579
    %v949 = vpop.f32.mrb[0].mxu0
    %v950 = vadd.f32 0.0, %v949
    %v951 = vpop.f32.mrb[0].mxu0
    %v952 = vpop.f32.mrb[0].mxu0
    %v953 = vadd.f32 0.0, %v952
    %v954 = vpop.f32.mrb[0].mxu0
    %955 = vmatprep.mubr.bf16.mxu0 0
    %956 = vmatmul.mubr.bf16.gmra.mrb[0].mxu0 %v580
    %v957 = vpop.f32.mrb[0].mxu0
    %v958 = vadd.f32 0.0, %v957
    %v959 = vpop.f32.mrb[0].mxu0
    %v960 = vpop.f32.mrb[0].mxu0
    %v961 = vadd.f32 0.0, %v960
    %v962 = vpop.f32.mrb[0].mxu0
    %963 = vmatprep.mubr.bf16.mxu0 0
    %964 = vmatmul.mubr.bf16.gmra.mrb[0].mxu0 %v581
    %v965 = vpop.f32.mrb[0].mxu0
    %v966 = vadd.f32 0.0, %v965
    %v967 = vpop.f32.mrb[0].mxu0
    %v968 = vpop.f32.mrb[0].mxu0
    %v969 = vadd.f32 0.0, %v968
    %v970 = vpop.f32.mrb[0].mxu0
    %971 = vmatprep.mubr.bf16.mxu0 0
    %972 = vmatmul.mubr.bf16.gmra.mrb[0].mxu0 %v582
    %v973 = vpop.f32.mrb[0].mxu0
    %v974 = vadd.f32 0.0, %v973
    %v975 = vpop.f32.mrb[0].mxu0
    %v976 = vpop.f32.mrb[0].mxu0
    %v977 = vadd.f32 0.0, %v976
    %v978 = vpop.f32.mrb[0].mxu0
    %979 = vmatprep.mubr.bf16.mxu0 0
    %980 = vmatmul.mubr.bf16.gmra.mrb[0].mxu0 %v583
    %v981 = vpop.f32.mrb[0].mxu0
    %v982 = vadd.f32 0.0, %v981
    %v983 = vpop.f32.mrb[0].mxu0
    %v984 = vpop.f32.mrb[0].mxu0
    %v985 = vadd.f32 0.0, %v984
    %v986 = vpop.f32.mrb[0].mxu0
    %987 = vmatprep.mubr.bf16.mxu0 0
    %988 = vmatmul.mubr.bf16.gmra.mrb[0].mxu0 %v584
    %v989 = vpop.f32.mrb[0].mxu0
    %v990 = vadd.f32 0.0, %v989
    %v991 = vpop.f32.mrb[0].mxu0
    %v992 = vpop.f32.mrb[0].mxu0
    %v993 = vadd.f32 0.0, %v992
    %v994 = vpop.f32.mrb[0].mxu0
    %995 = vdwg.mxu0
    %v996 = vpack.c.bf16 %v937, %v934
    %v997 = vpack.c.bf16 %v945, %v942
    %v998 = vpack.c.bf16 %v953, %v950
    %v999 = vpack.c.bf16 %v961, %v958
    %v1000 = vpack.c.bf16 %v969, %v966
    %v1001 = vpack.c.bf16 %v977, %v974
    %v1002 = vpack.c.bf16 %v985, %v982
    %v1003 = vpack.c.bf16 %v993, %v990
    %1004 = vmatprep.subr.bf16.mxu0 0
    %1005 = vmatpush1.bf16.msra.mxu0 %v746
    %1006 = vmatprep.subr.bf16.mxu0 0
    %1007 = vmatpush1.bf16.msra.mxu0 %v747
    %1008 = vmatprep.subr.bf16.mxu0 0
    %1009 = vmatpush1.bf16.msra.mxu0 %v748
    %1010 = vmatprep.subr.bf16.mxu0 0
    %1011 = vmatpush1.bf16.msra.mxu0 %v749
    %1012 = vmatprep.subr.bf16.mxu0 0
    %1013 = vmatpush1.bf16.msra.mxu0 %v750
    %1014 = vmatprep.subr.bf16.mxu0 0
    %1015 = vmatpush1.bf16.msra.mxu0 %v751
    %1016 = vmatprep.subr.bf16.mxu0 0
    %1017 = vmatpush1.bf16.msra.mxu0 %v752
    %1018 = vmatprep.subr.bf16.mxu0 0
    %1019 = vmatpush1.bf16.msra.mxu0 %v753
    %1020 = vmatprep.subr.bf16.mxu0 0
    %1021 = vmatpush1.bf16.msra.mxu0 0
    %1022 = vmatprep.subr.bf16.mxu0 0
    %1023 = vmatpush1.bf16.msra.mxu0 0
    %1024 = vmatprep.subr.bf16.mxu0 0
    %1025 = vmatpush1.bf16.msra.mxu0 0
    %1026 = vmatprep.subr.bf16.mxu0 0
    %1027 = vmatpush1.bf16.msra.mxu0 0
    %1028 = vmatprep.subr.bf16.mxu0 0
    %1029 = vmatpush1.bf16.msra.mxu0 0
    %1030 = vmatprep.subr.bf16.mxu0 0
    %1031 = vmatpush1.bf16.msra.mxu0 0
    %1032 = vmatprep.subr.bf16.mxu0 0
    %1033 = vmatpush1.bf16.msra.mxu0 0
    %1034 = vmatprep.subr.bf16.mxu0 0
    %1035 = vmatpush1.bf16.msra.mxu0 0
    %1036 = vmatprep.mubr.bf16.mxu0 0
    %1037 = vmatmul.mubr.bf16.gmra.mrb[0].mxu0 %v996
    %v1038 = vpop.f32.mrb[0].mxu0
    %v1039 = vadd.f32 0.0, %v1038
    %v1040 = vpop.f32.mrb[0].mxu0
    %v1041 = vpop.f32.mrb[0].mxu0
    %v1042 = vadd.f32 0.0, %v1041
    %v1043 = vpop.f32.mrb[0].mxu0
    %1044 = vmatprep.mubr.bf16.mxu0 0
    %1045 = vmatmul.mubr.bf16.gmra.mrb[0].mxu0 %v997
    %v1046 = vpop.f32.mrb[0].mxu0
    %v1047 = vadd.f32 0.0, %v1046
    %v1048 = vpop.f32.mrb[0].mxu0
    %v1049 = vpop.f32.mrb[0].mxu0
    %v1050 = vadd.f32 0.0, %v1049
    %v1051 = vpop.f32.mrb[0].mxu0
    %1052 = vmatprep.mubr.bf16.mxu0 0
    %1053 = vmatmul.mubr.bf16.gmra.mrb[0].mxu0 %v998
    %v1054 = vpop.f32.mrb[0].mxu0
    %v1055 = vadd.f32 0.0, %v1054
    %v1056 = vpop.f32.mrb[0].mxu0
    %v1057 = vpop.f32.mrb[0].mxu0
    %v1058 = vadd.f32 0.0, %v1057
    %v1059 = vpop.f32.mrb[0].mxu0
    %1060 = vmatprep.mubr.bf16.mxu0 0
    %1061 = vmatmul.mubr.bf16.gmra.mrb[0].mxu0 %v999
    %v1062 = vpop.f32.mrb[0].mxu0
    %v1063 = vadd.f32 0.0, %v1062
    %v1064 = vpop.f32.mrb[0].mxu0
    %v1065 = vpop.f32.mrb[0].mxu0
    %v1066 = vadd.f32 0.0, %v1065
    %v1067 = vpop.f32.mrb[0].mxu0
    %1068 = vmatprep.mubr.bf16.mxu0 0
    %1069 = vmatmul.mubr.bf16.gmra.mrb[0].mxu0 %v1000
    %v1070 = vpop.f32.mrb[0].mxu0
    %v1071 = vadd.f32 0.0, %v1070
    %v1072 = vpop.f32.mrb[0].mxu0
    %v1073 = vpop.f32.mrb[0].mxu0
    %v1074 = vadd.f32 0.0, %v1073
    %v1075 = vpop.f32.mrb[0].mxu0
    %1076 = vmatprep.mubr.bf16.mxu0 0
    %1077 = vmatmul.mubr.bf16.gmra.mrb[0].mxu0 %v1001
    %v1078 = vpop.f32.mrb[0].mxu0
    %v1079 = vadd.f32 0.0, %v1078
    %v1080 = vpop.f32.mrb[0].mxu0
    %v1081 = vpop.f32.mrb[0].mxu0
    %v1082 = vadd.f32 0.0, %v1081
    %v1083 = vpop.f32.mrb[0].mxu0
    %1084 = vmatprep.mubr.bf16.mxu0 0
    %1085 = vmatmul.mubr.bf16.gmra.mrb[0].mxu0 %v1002
    %v1086 = vpop.f32.mrb[0].mxu0
    %v1087 = vadd.f32 0.0, %v1086
    %v1088 = vpop.f32.mrb[0].mxu0
    %v1089 = vpop.f32.mrb[0].mxu0
    %v1090 = vadd.f32 0.0, %v1089
    %v1091 = vpop.f32.mrb[0].mxu0
    %1092 = vmatprep.mubr.bf16.mxu0 0
    %1093 = vmatmul.mubr.bf16.gmra.mrb[0].mxu0 %v1003
    %v1094 = vpop.f32.mrb[0].mxu0
    %v1095 = vadd.f32 0.0, %v1094
    %v1096 = vpop.f32.mrb[0].mxu0
    %v1097 = vpop.f32.mrb[0].mxu0
    %v1098 = vadd.f32 0.0, %v1097
    %v1099 = vpop.f32.mrb[0].mxu0
    %1100 = vdwg.mxu0
    %v1101 = vadd.f32 %v443, %v1039
    %v1102 = vadd.f32 %v446, %v1042
    %v1103 = vadd.f32 %v451, %v1047
    %v1104 = vadd.f32 %v454, %v1050
    %v1105 = vadd.f32 %v459, %v1055
    %v1106 = vadd.f32 %v462, %v1058
    %v1107 = vadd.f32 %v467, %v1063
    %v1108 = vadd.f32 %v470, %v1066
    %v1109 = vadd.f32 %v475, %v1071
    %v1110 = vadd.f32 %v478, %v1074
    %v1111 = vadd.f32 %v483, %v1079
    %v1112 = vadd.f32 %v486, %v1082
    %v1113 = vadd.f32 %v491, %v1087
    %v1114 = vadd.f32 %v494, %v1090
    %v1115 = vadd.f32 %v499, %v1095
    %v1116 = vadd.f32 %v502, %v1098
    %v1117 = vmax.f32 %v1101, 0.0
    %v1118 = vmax.f32 %v1102, 0.0
    %v1119 = vmax.f32 %v1103, 0.0
    %v1120 = vmax.f32 %v1104, 0.0
    %v1121 = vmax.f32 %v1105, 0.0
    %v1122 = vmax.f32 %v1106, 0.0
    %v1123 = vmax.f32 %v1107, 0.0
    %v1124 = vmax.f32 %v1108, 0.0
    %v1125 = vmax.f32 %v1109, 0.0
    %v1126 = vmax.f32 %v1110, 0.0
    %v1127 = vmax.f32 %v1111, 0.0
    %v1128 = vmax.f32 %v1112, 0.0
    %v1129 = vmax.f32 %v1113, 0.0
    %v1130 = vmax.f32 %v1114, 0.0
    %v1131 = vmax.f32 %v1115, 0.0
    %v1132 = vmax.f32 %v1116, 0.0
    %v1133 = vpack.c.bf16 %v1118, %v1117
    %v1134 = vpack.c.bf16 %v1120, %v1119
    %v1135 = vpack.c.bf16 %v1122, %v1121
    %v1136 = vpack.c.bf16 %v1124, %v1123
    %v1137 = vpack.c.bf16 %v1126, %v1125
    %v1138 = vpack.c.bf16 %v1128, %v1127
    %v1139 = vpack.c.bf16 %v1130, %v1129
    %v1140 = vpack.c.bf16 %v1132, %v1131
    %v1141 = vld [vmem:[#allocation7] sm:$0xf]
    %v1142 = vld [vmem:[#allocation7 + $0x4] sm:$0xf]
    %v1143 = vld [vmem:[#allocation7 + $0x8] sm:$0xf]
    %v1144 = vld [vmem:[#allocation7 + $0xc] sm:$0xf]
    %v1145 = vld [vmem:[#allocation7 + $0x10] sm:$0xf]
    %v1146 = vld [vmem:[#allocation7 + $0x14] sm:$0xf]
    %v1147 = vld [vmem:[#allocation7 + $0x18] sm:$0xf]
    %v1148 = vld [vmem:[#allocation7 + $0x1c] sm:$0xf]
    %v1149 = vld [vmem:[#allocation7 + $0x20] sm:$0xf]
    %v1150 = vld [vmem:[#allocation7 + $0x24] sm:$0xf]
    %v1151 = vld [vmem:[#allocation7 + $0x28] sm:$0xf]
    %v1152 = vld [vmem:[#allocation7 + $0x2c] sm:$0xf]
    %v1153 = vld [vmem:[#allocation7 + $0x30] sm:$0xf]
    %v1154 = vld [vmem:[#allocation7 + $0x34] sm:$0xf]
    %v1155 = vld [vmem:[#allocation7 + $0x38] sm:$0xf]
    %v1156 = vld [vmem:[#allocation7 + $0x3c] sm:$0xf]
    %v1173 = vunpack.c.l.b16 %v1141
    %v1174 = vunpack.c.l.b16 %v1142
    %v1175 = vunpack.c.l.b16 %v1143
    %v1176 = vunpack.c.l.b16 %v1144
    %v1177 = vunpack.c.l.b16 %v1145
    %v1178 = vunpack.c.l.b16 %v1146
    %v1179 = vunpack.c.l.b16 %v1147
    %v1180 = vunpack.c.l.b16 %v1148
    %v1181 = vunpack.c.l.b16 %v1149
    %v1182 = vunpack.c.l.b16 %v1150
    %v1183 = vunpack.c.l.b16 %v1151
    %v1184 = vunpack.c.l.b16 %v1152
    %v1185 = vunpack.c.l.b16 %v1153
    %v1186 = vunpack.c.l.b16 %v1154
    %v1187 = vunpack.c.l.b16 %v1155
    %v1188 = vunpack.c.l.b16 %v1156
    %v1189 = vpack.c.b16 %v1174, %v1173
    %v1190 = vpack.c.b16 %v1176, %v1175
    %v1191 = vpack.c.b16 %v1178, %v1177
    %v1192 = vpack.c.b16 %v1180, %v1179
    %v1193 = vpack.c.b16 %v1182, %v1181
    %v1194 = vpack.c.b16 %v1184, %v1183
    %v1195 = vpack.c.b16 %v1186, %v1185
    %v1196 = vpack.c.b16 %v1188, %v1187
    %1205 = vmatprep.subr.bf16.mxu0 0
    %1206 = vmatpush1.bf16.msra.mxu0 %v1133
    %1207 = vmatprep.subr.bf16.mxu0 0
    %1208 = vmatpush1.bf16.msra.mxu0 %v1134
    %1209 = vmatprep.subr.bf16.mxu0 0
    %1210 = vmatpush1.bf16.msra.mxu0 %v1135
    %1211 = vmatprep.subr.bf16.mxu0 0
    %1212 = vmatpush1.bf16.msra.mxu0 %v1136
    %1213 = vmatprep.subr.bf16.mxu0 0
    %1214 = vmatpush1.bf16.msra.mxu0 %v1137
    %1215 = vmatprep.subr.bf16.mxu0 0
    %1216 = vmatpush1.bf16.msra.mxu0 %v1138
    %1217 = vmatprep.subr.bf16.mxu0 0
    %1218 = vmatpush1.bf16.msra.mxu0 %v1139
    %1219 = vmatprep.subr.bf16.mxu0 0
    %1220 = vmatpush1.bf16.msra.mxu0 %v1140
    %1221 = vmatprep.subr.bf16.mxu0 0
    %1222 = vmatpush1.bf16.msra.mxu0 0
    %1223 = vmatprep.subr.bf16.mxu0 0
    %1224 = vmatpush1.bf16.msra.mxu0 0
    %1225 = vmatprep.subr.bf16.mxu0 0
    %1226 = vmatpush1.bf16.msra.mxu0 0
    %1227 = vmatprep.subr.bf16.mxu0 0
    %1228 = vmatpush1.bf16.msra.mxu0 0
    %1229 = vmatprep.subr.bf16.mxu0 0
    %1230 = vmatpush1.bf16.msra.mxu0 0
    %1231 = vmatprep.subr.bf16.mxu0 0
    %1232 = vmatpush1.bf16.msra.mxu0 0
    %1233 = vmatprep.subr.bf16.mxu0 0
    %1234 = vmatpush1.bf16.msra.mxu0 0
    %1235 = vmatprep.subr.bf16.mxu0 0
    %1236 = vmatpush1.bf16.msra.mxu0 0
    %1237 = vmatprep.mubr.bf16.mxu0 0
    %1238 = vmatmul.mubr.bf16.gmra.mrb[0].mxu0 %v1189
    %v1239 = vpop.f32.mrb[0].mxu0
    %v1240 = vadd.f32 0.0, %v1239
    %v1241 = vpop.f32.mrb[0].mxu0
    %v1242 = vpop.f32.mrb[0].mxu0
    %v1243 = vadd.f32 0.0, %v1242
    %v1244 = vpop.f32.mrb[0].mxu0
    %1245 = vmatprep.mubr.bf16.mxu0 0
    %1246 = vmatmul.mubr.bf16.gmra.mrb[0].mxu0 %v1190
    %v1247 = vpop.f32.mrb[0].mxu0
    %v1248 = vadd.f32 0.0, %v1247
    %v1249 = vpop.f32.mrb[0].mxu0
    %v1250 = vpop.f32.mrb[0].mxu0
    %v1251 = vadd.f32 0.0, %v1250
    %v1252 = vpop.f32.mrb[0].mxu0
    %1253 = vmatprep.mubr.bf16.mxu0 0
    %1254 = vmatmul.mubr.bf16.gmra.mrb[0].mxu0 %v1191
    %v1255 = vpop.f32.mrb[0].mxu0
    %v1256 = vadd.f32 0.0, %v1255
    %v1257 = vpop.f32.mrb[0].mxu0
    %v1258 = vpop.f32.mrb[0].mxu0
    %v1259 = vadd.f32 0.0, %v1258
    %v1260 = vpop.f32.mrb[0].mxu0
    %1261 = vmatprep.mubr.bf16.mxu0 0
    %1262 = vmatmul.mubr.bf16.gmra.mrb[0].mxu0 %v1192
    %v1263 = vpop.f32.mrb[0].mxu0
    %v1264 = vadd.f32 0.0, %v1263
    %v1265 = vpop.f32.mrb[0].mxu0
    %v1266 = vpop.f32.mrb[0].mxu0
    %v1267 = vadd.f32 0.0, %v1266
    %v1268 = vpop.f32.mrb[0].mxu0
    %1269 = vmatprep.mubr.bf16.mxu0 0
    %1270 = vmatmul.mubr.bf16.gmra.mrb[0].mxu0 %v1193
    %v1271 = vpop.f32.mrb[0].mxu0
    %v1272 = vadd.f32 0.0, %v1271
    %v1273 = vpop.f32.mrb[0].mxu0
    %v1274 = vpop.f32.mrb[0].mxu0
    %v1275 = vadd.f32 0.0, %v1274
    %v1276 = vpop.f32.mrb[0].mxu0
    %1277 = vmatprep.mubr.bf16.mxu0 0
    %1278 = vmatmul.mubr.bf16.gmra.mrb[0].mxu0 %v1194
    %v1279 = vpop.f32.mrb[0].mxu0
    %v1280 = vadd.f32 0.0, %v1279
    %v1281 = vpop.f32.mrb[0].mxu0
    %v1282 = vpop.f32.mrb[0].mxu0
    %v1283 = vadd.f32 0.0, %v1282
    %v1284 = vpop.f32.mrb[0].mxu0
    %1285 = vmatprep.mubr.bf16.mxu0 0
    %1286 = vmatmul.mubr.bf16.gmra.mrb[0].mxu0 %v1195
    %v1287 = vpop.f32.mrb[0].mxu0
    %v1288 = vadd.f32 0.0, %v1287
    %v1289 = vpop.f32.mrb[0].mxu0
    %v1290 = vpop.f32.mrb[0].mxu0
    %v1291 = vadd.f32 0.0, %v1290
    %v1292 = vpop.f32.mrb[0].mxu0
    %1293 = vmatprep.mubr.bf16.mxu0 0
    %1294 = vmatmul.mubr.bf16.gmra.mrb[0].mxu0 %v1196
    %v1295 = vpop.f32.mrb[0].mxu0
    %v1296 = vadd.f32 0.0, %v1295
    %v1297 = vpop.f32.mrb[0].mxu0
    %v1298 = vpop.f32.mrb[0].mxu0
    %v1299 = vadd.f32 0.0, %v1298
    %v1300 = vpop.f32.mrb[0].mxu0
    %1301 = vdwg.mxu0
    %v1302 = vld [vmem:[#allocation2] sm:$0xff]
    %v1303 = vld [vmem:[#allocation2 + $0x8] sm:$0xff]
    %v1304 = vld [vmem:[#allocation2 + $0x10] sm:$0xff]
    %v1305 = vld [vmem:[#allocation2 + $0x18] sm:$0xff]
    %v1306 = vld [vmem:[#allocation2 + $0x20] sm:$0xff]
    %v1307 = vld [vmem:[#allocation2 + $0x28] sm:$0xff]
    %v1308 = vld [vmem:[#allocation2 + $0x30] sm:$0xff]
    %v1309 = vld [vmem:[#allocation2 + $0x38] sm:$0xff]
    %v1310 = vld [vmem:[#allocation2 + $0x40] sm:$0xff]
    %v1311 = vld [vmem:[#allocation2 + $0x48] sm:$0xff]
    %v1312 = vld [vmem:[#allocation2 + $0x50] sm:$0xff]
    %v1313 = vld [vmem:[#allocation2 + $0x58] sm:$0xff]
    %v1314 = vld [vmem:[#allocation2 + $0x60] sm:$0xff]
    %v1315 = vld [vmem:[#allocation2 + $0x68] sm:$0xff]
    %v1316 = vld [vmem:[#allocation2 + $0x70] sm:$0xff]
    %v1317 = vld [vmem:[#allocation2 + $0x78] sm:$0xff]
    %v1318 = vld [vmem:[#allocation12] sm:$0xf]
    %v1319 = vld [vmem:[#allocation12 + $0x4] sm:$0xf]
    %v1320 = vld [vmem:[#allocation12 + $0x8] sm:$0xf]
    %v1321 = vld [vmem:[#allocation12 + $0xc] sm:$0xf]
    %v1322 = vld [vmem:[#allocation12 + $0x10] sm:$0xf]
    %v1323 = vld [vmem:[#allocation12 + $0x14] sm:$0xf]
    %v1324 = vld [vmem:[#allocation12 + $0x18] sm:$0xf]
    %v1325 = vld [vmem:[#allocation12 + $0x1c] sm:$0xf]
    %v1326 = vld [vmem:[#allocation12 + $0x20] sm:$0xf]
    %v1327 = vld [vmem:[#allocation12 + $0x24] sm:$0xf]
    %v1328 = vld [vmem:[#allocation12 + $0x28] sm:$0xf]
    %v1329 = vld [vmem:[#allocation12 + $0x2c] sm:$0xf]
    %v1330 = vld [vmem:[#allocation12 + $0x30] sm:$0xf]
    %v1331 = vld [vmem:[#allocation12 + $0x34] sm:$0xf]
    %v1332 = vld [vmem:[#allocation12 + $0x38] sm:$0xf]
    %v1333 = vld [vmem:[#allocation12 + $0x3c] sm:$0xf]
    %v1334 = vld [vmem:[#allocation12 + $0x40] sm:$0xf]
    %v1335 = vld [vmem:[#allocation12 + $0x44] sm:$0xf]
    %v1336 = vld [vmem:[#allocation12 + $0x48] sm:$0xf]
    %v1337 = vld [vmem:[#allocation12 + $0x4c] sm:$0xf]
    %v1338 = vld [vmem:[#allocation12 + $0x50] sm:$0xf]
    %v1339 = vld [vmem:[#allocation12 + $0x54] sm:$0xf]
    %v1340 = vld [vmem:[#allocation12 + $0x58] sm:$0xf]
    %v1341 = vld [vmem:[#allocation12 + $0x5c] sm:$0xf]
    %v1342 = vld [vmem:[#allocation12 + $0x60] sm:$0xf]
    %v1343 = vld [vmem:[#allocation12 + $0x64] sm:$0xf]
    %v1344 = vld [vmem:[#allocation12 + $0x68] sm:$0xf]
    %v1345 = vld [vmem:[#allocation12 + $0x6c] sm:$0xf]
    %v1346 = vld [vmem:[#allocation12 + $0x70] sm:$0xf]
    %v1347 = vld [vmem:[#allocation12 + $0x74] sm:$0xf]
    %v1348 = vld [vmem:[#allocation12 + $0x78] sm:$0xf]
    %v1349 = vld [vmem:[#allocation12 + $0x7c] sm:$0xf]
    %v1350 = vpack.c.bf16 %v1243, %v1240
    %v1351 = vpack.c.bf16 %v1251, %v1248
    %v1352 = vpack.c.bf16 %v1259, %v1256
    %v1353 = vpack.c.bf16 %v1267, %v1264
    %v1354 = vpack.c.bf16 %v1275, %v1272
    %v1355 = vpack.c.bf16 %v1283, %v1280
    %v1356 = vpack.c.bf16 %v1291, %v1288
    %v1357 = vpack.c.bf16 %v1299, %v1296
    %v1358 = vld [vmem:[#allocation13] sm:$0xf]
    %v1359 = vld [vmem:[#allocation13 + $0x4] sm:$0xf]
    %v1360 = vld [vmem:[#allocation13 + $0x8] sm:$0xf]
    %v1361 = vld [vmem:[#allocation13 + $0xc] sm:$0xf]
    %v1362 = vld [vmem:[#allocation13 + $0x10] sm:$0xf]
    %v1363 = vld [vmem:[#allocation13 + $0x14] sm:$0xf]
    %v1364 = vld [vmem:[#allocation13 + $0x18] sm:$0xf]
    %v1365 = vld [vmem:[#allocation13 + $0x1c] sm:$0xf]
    %v1366 = vld [vmem:[#allocation13 + $0x20] sm:$0xf]
    %v1367 = vld [vmem:[#allocation13 + $0x24] sm:$0xf]
    %v1368 = vld [vmem:[#allocation13 + $0x28] sm:$0xf]
    %v1369 = vld [vmem:[#allocation13 + $0x2c] sm:$0xf]
    %v1370 = vld [vmem:[#allocation13 + $0x30] sm:$0xf]
    %v1371 = vld [vmem:[#allocation13 + $0x34] sm:$0xf]
    %v1372 = vld [vmem:[#allocation13 + $0x38] sm:$0xf]
    %v1373 = vld [vmem:[#allocation13 + $0x3c] sm:$0xf]
    %v1390 = vunpack.c.l.b16 %v1358
    %v1391 = vunpack.c.l.b16 %v1359
    %v1392 = vunpack.c.l.b16 %v1360
    %v1393 = vunpack.c.l.b16 %v1361
    %v1394 = vunpack.c.l.b16 %v1362
    %v1395 = vunpack.c.l.b16 %v1363
    %v1396 = vunpack.c.l.b16 %v1364
    %v1397 = vunpack.c.l.b16 %v1365
    %v1398 = vunpack.c.l.b16 %v1366
    %v1399 = vunpack.c.l.b16 %v1367
    %v1400 = vunpack.c.l.b16 %v1368
    %v1401 = vunpack.c.l.b16 %v1369
    %v1402 = vunpack.c.l.b16 %v1370
    %v1403 = vunpack.c.l.b16 %v1371
    %v1404 = vunpack.c.l.b16 %v1372
    %v1405 = vunpack.c.l.b16 %v1373
    %v1406 = vpack.c.b16 %v1391, %v1390
    %v1407 = vpack.c.b16 %v1393, %v1392
    %v1408 = vpack.c.b16 %v1395, %v1394
    %v1409 = vpack.c.b16 %v1397, %v1396
    %v1410 = vpack.c.b16 %v1399, %v1398
    %v1411 = vpack.c.b16 %v1401, %v1400
    %v1412 = vpack.c.b16 %v1403, %v1402
    %v1413 = vpack.c.b16 %v1405, %v1404
    %1422 = vmatprep.subr.bf16.mxu0 0
    %1423 = vmatpush1.bf16.msra.mxu0 %v1406
    %1424 = vmatprep.subr.bf16.mxu0 0
    %1425 = vmatpush1.bf16.msra.mxu0 %v1407
    %1426 = vmatprep.subr.bf16.mxu0 0
    %1427 = vmatpush1.bf16.msra.mxu0 %v1408
    %1428 = vmatprep.subr.bf16.mxu0 0
    %1429 = vmatpush1.bf16.msra.mxu0 %v1409
    %1430 = vmatprep.subr.bf16.mxu0 0
    %1431 = vmatpush1.bf16.msra.mxu0 %v1410
    %1432 = vmatprep.subr.bf16.mxu0 0
    %1433 = vmatpush1.bf16.msra.mxu0 %v1411
    %1434 = vmatprep.subr.bf16.mxu0 0
    %1435 = vmatpush1.bf16.msra.mxu0 %v1412
    %1436 = vmatprep.subr.bf16.mxu0 0
    %1437 = vmatpush1.bf16.msra.mxu0 %v1413
    %1438 = vmatprep.subr.bf16.mxu0 0
    %1439 = vmatpush1.bf16.msra.mxu0 0
    %1440 = vmatprep.subr.bf16.mxu0 0
    %1441 = vmatpush1.bf16.msra.mxu0 0
    %1442 = vmatprep.subr.bf16.mxu0 0
    %1443 = vmatpush1.bf16.msra.mxu0 0
    %1444 = vmatprep.subr.bf16.mxu0 0
    %1445 = vmatpush1.bf16.msra.mxu0 0
    %1446 = vmatprep.subr.bf16.mxu0 0
    %1447 = vmatpush1.bf16.msra.mxu0 0
    %1448 = vmatprep.subr.bf16.mxu0 0
    %1449 = vmatpush1.bf16.msra.mxu0 0
    %1450 = vmatprep.subr.bf16.mxu0 0
    %1451 = vmatpush1.bf16.msra.mxu0 0
    %1452 = vmatprep.subr.bf16.mxu0 0
    %1453 = vmatpush1.bf16.msra.mxu0 0
    %1454 = vmatprep.mubr.bf16.mxu0 0
    %1455 = vmatmul.mubr.bf16.gmra.mrb[0].mxu0 %v1350
    %v1456 = vpop.f32.mrb[0].mxu0
    %v1457 = vadd.f32 0.0, %v1456
    %v1458 = vpop.f32.mrb[0].mxu0
    %v1459 = vpop.f32.mrb[0].mxu0
    %v1460 = vadd.f32 0.0, %v1459
    %v1461 = vpop.f32.mrb[0].mxu0
    %1462 = vmatprep.mubr.bf16.mxu0 0
    %1463 = vmatmul.mubr.bf16.gmra.mrb[0].mxu0 %v1351
    %v1464 = vpop.f32.mrb[0].mxu0
    %v1465 = vadd.f32 0.0, %v1464
    %v1466 = vpop.f32.mrb[0].mxu0
    %v1467 = vpop.f32.mrb[0].mxu0
    %v1468 = vadd.f32 0.0, %v1467
    %v1469 = vpop.f32.mrb[0].mxu0
    %1470 = vmatprep.mubr.bf16.mxu0 0
    %1471 = vmatmul.mubr.bf16.gmra.mrb[0].mxu0 %v1352
    %v1472 = vpop.f32.mrb[0].mxu0
    %v1473 = vadd.f32 0.0, %v1472
    %v1474 = vpop.f32.mrb[0].mxu0
    %v1475 = vpop.f32.mrb[0].mxu0
    %v1476 = vadd.f32 0.0, %v1475
    %v1477 = vpop.f32.mrb[0].mxu0
    %1478 = vmatprep.mubr.bf16.mxu0 0
    %1479 = vmatmul.mubr.bf16.gmra.mrb[0].mxu0 %v1353
    %v1480 = vpop.f32.mrb[0].mxu0
    %v1481 = vadd.f32 0.0, %v1480
    %v1482 = vpop.f32.mrb[0].mxu0
    %v1483 = vpop.f32.mrb[0].mxu0
    %v1484 = vadd.f32 0.0, %v1483
    %v1485 = vpop.f32.mrb[0].mxu0
    %1486 = vmatprep.mubr.bf16.mxu0 0
    %1487 = vmatmul.mubr.bf16.gmra.mrb[0].mxu0 %v1354
    %v1488 = vpop.f32.mrb[0].mxu0
    %v1489 = vadd.f32 0.0, %v1488
    %v1490 = vpop.f32.mrb[0].mxu0
    %v1491 = vpop.f32.mrb[0].mxu0
    %v1492 = vadd.f32 0.0, %v1491
    %v1493 = vpop.f32.mrb[0].mxu0
    %1494 = vmatprep.mubr.bf16.mxu0 0
    %1495 = vmatmul.mubr.bf16.gmra.mrb[0].mxu0 %v1355
    %v1496 = vpop.f32.mrb[0].mxu0
    %v1497 = vadd.f32 0.0, %v1496
    %v1498 = vpop.f32.mrb[0].mxu0
    %v1499 = vpop.f32.mrb[0].mxu0
    %v1500 = vadd.f32 0.0, %v1499
    %v1501 = vpop.f32.mrb[0].mxu0
    %1502 = vmatprep.mubr.bf16.mxu0 0
    %1503 = vmatmul.mubr.bf16.gmra.mrb[0].mxu0 %v1356
    %v1504 = vpop.f32.mrb[0].mxu0
    %v1505 = vadd.f32 0.0, %v1504
    %v1506 = vpop.f32.mrb[0].mxu0
    %v1507 = vpop.f32.mrb[0].mxu0
    %v1508 = vadd.f32 0.0, %v1507
    %v1509 = vpop.f32.mrb[0].mxu0
    %1510 = vmatprep.mubr.bf16.mxu0 0
    %1511 = vmatmul.mubr.bf16.gmra.mrb[0].mxu0 %v1357
    %v1512 = vpop.f32.mrb[0].mxu0
    %v1513 = vadd.f32 0.0, %v1512
    %v1514 = vpop.f32.mrb[0].mxu0
    %v1515 = vpop.f32.mrb[0].mxu0
    %v1516 = vadd.f32 0.0, %v1515
    %v1517 = vpop.f32.mrb[0].mxu0
    %1518 = vdwg.mxu0
    %v1535 = vunpack.c.l.b16 %v1302
    %v1536 = vunpack.c.h.b16 %v1302
    %v1537 = vunpack.c.l.b16 %v1303
    %v1538 = vunpack.c.h.b16 %v1303
    %v1539 = vunpack.c.l.b16 %v1304
    %v1540 = vunpack.c.h.b16 %v1304
    %v1541 = vunpack.c.l.b16 %v1305
    %v1542 = vunpack.c.h.b16 %v1305
    %v1543 = vunpack.c.l.b16 %v1306
    %v1544 = vunpack.c.h.b16 %v1306
    %v1545 = vunpack.c.l.b16 %v1307
    %v1546 = vunpack.c.h.b16 %v1307
    %v1547 = vunpack.c.l.b16 %v1308
    %v1548 = vunpack.c.h.b16 %v1308
    %v1549 = vunpack.c.l.b16 %v1309
    %v1550 = vunpack.c.h.b16 %v1309
    %v1551 = vunpack.c.l.b16 %v1310
    %v1552 = vunpack.c.h.b16 %v1310
    %v1553 = vunpack.c.l.b16 %v1311
    %v1554 = vunpack.c.h.b16 %v1311
    %v1555 = vunpack.c.l.b16 %v1312
    %v1556 = vunpack.c.h.b16 %v1312
    %v1557 = vunpack.c.l.b16 %v1313
    %v1558 = vunpack.c.h.b16 %v1313
    %v1559 = vunpack.c.l.b16 %v1314
    %v1560 = vunpack.c.h.b16 %v1314
    %v1561 = vunpack.c.l.b16 %v1315
    %v1562 = vunpack.c.h.b16 %v1315
    %v1563 = vunpack.c.l.b16 %v1316
    %v1564 = vunpack.c.h.b16 %v1316
    %v1565 = vunpack.c.l.b16 %v1317
    %v1566 = vunpack.c.h.b16 %v1317
    %v1567 = vpack.c.b16 %v1537, %v1535
    %v1568 = vpack.c.b16 %v1538, %v1536
    %v1569 = vpack.c.b16 %v1541, %v1539
    %v1570 = vpack.c.b16 %v1542, %v1540
    %v1571 = vpack.c.b16 %v1545, %v1543
    %v1572 = vpack.c.b16 %v1546, %v1544
    %v1573 = vpack.c.b16 %v1549, %v1547
    %v1574 = vpack.c.b16 %v1550, %v1548
    %v1575 = vpack.c.b16 %v1553, %v1551
    %v1576 = vpack.c.b16 %v1554, %v1552
    %v1577 = vpack.c.b16 %v1557, %v1555
    %v1578 = vpack.c.b16 %v1558, %v1556
    %v1579 = vpack.c.b16 %v1561, %v1559
    %v1580 = vpack.c.b16 %v1562, %v1560
    %v1581 = vpack.c.b16 %v1565, %v1563
    %v1582 = vpack.c.b16 %v1566, %v1564
    %v1631 = vunpack.c.l.b16 %v1318
    %v1632 = vunpack.c.l.b16 %v1319
    %v1633 = vunpack.c.l.b16 %v1320
    %v1634 = vunpack.c.l.b16 %v1321
    %v1635 = vunpack.c.l.b16 %v1322
    %v1636 = vunpack.c.l.b16 %v1323
    %v1637 = vunpack.c.l.b16 %v1324
    %v1638 = vunpack.c.l.b16 %v1325
    %v1639 = vunpack.c.l.b16 %v1326
    %v1640 = vunpack.c.l.b16 %v1327
    %v1641 = vunpack.c.l.b16 %v1328
    %v1642 = vunpack.c.l.b16 %v1329
    %v1643 = vunpack.c.l.b16 %v1330
    %v1644 = vunpack.c.l.b16 %v1331
    %v1645 = vunpack.c.l.b16 %v1332
    %v1646 = vunpack.c.l.b16 %v1333
    %v1647 = vunpack.c.l.b16 %v1334
    %v1648 = vunpack.c.l.b16 %v1335
    %v1649 = vunpack.c.l.b16 %v1336
    %v1650 = vunpack.c.l.b16 %v1337
    %v1651 = vunpack.c.l.b16 %v1338
    %v1652 = vunpack.c.l.b16 %v1339
    %v1653 = vunpack.c.l.b16 %v1340
    %v1654 = vunpack.c.l.b16 %v1341
    %v1655 = vunpack.c.l.b16 %v1342
    %v1656 = vunpack.c.l.b16 %v1343
    %v1657 = vunpack.c.l.b16 %v1344
    %v1658 = vunpack.c.l.b16 %v1345
    %v1659 = vunpack.c.l.b16 %v1346
    %v1660 = vunpack.c.l.b16 %v1347
    %v1661 = vunpack.c.l.b16 %v1348
    %v1662 = vunpack.c.l.b16 %v1349
    %v1663 = vpack.c.b16 %v1632, %v1631
    %v1664 = vpack.c.b16 %v1634, %v1633
    %v1665 = vpack.c.b16 %v1636, %v1635
    %v1666 = vpack.c.b16 %v1638, %v1637
    %v1667 = vpack.c.b16 %v1640, %v1639
    %v1668 = vpack.c.b16 %v1642, %v1641
    %v1669 = vpack.c.b16 %v1644, %v1643
    %v1670 = vpack.c.b16 %v1646, %v1645
    %v1671 = vpack.c.b16 %v1648, %v1647
    %v1672 = vpack.c.b16 %v1650, %v1649
    %v1673 = vpack.c.b16 %v1652, %v1651
    %v1674 = vpack.c.b16 %v1654, %v1653
    %v1675 = vpack.c.b16 %v1656, %v1655
    %v1676 = vpack.c.b16 %v1658, %v1657
    %v1677 = vpack.c.b16 %v1660, %v1659
    %v1678 = vpack.c.b16 %v1662, %v1661
    %1695 = vmatprep.subr.bf16.mxu0 0
    %1696 = vmatpush1.bf16.msra.mxu0 %v1663
    %1697 = vmatprep.subr.bf16.mxu0 0
    %1698 = vmatpush1.bf16.msra.mxu0 %v1664
    %1699 = vmatprep.subr.bf16.mxu0 0
    %1700 = vmatpush1.bf16.msra.mxu0 %v1665
    %1701 = vmatprep.subr.bf16.mxu0 0
    %1702 = vmatpush1.bf16.msra.mxu0 %v1666
    %1703 = vmatprep.subr.bf16.mxu0 0
    %1704 = vmatpush1.bf16.msra.mxu0 %v1667
    %1705 = vmatprep.subr.bf16.mxu0 0
    %1706 = vmatpush1.bf16.msra.mxu0 %v1668
    %1707 = vmatprep.subr.bf16.mxu0 0
    %1708 = vmatpush1.bf16.msra.mxu0 %v1669
    %1709 = vmatprep.subr.bf16.mxu0 0
    %1710 = vmatpush1.bf16.msra.mxu0 %v1670
    %1711 = vmatprep.subr.bf16.mxu0 0
    %1712 = vmatpush1.bf16.msra.mxu0 %v1671
    %1713 = vmatprep.subr.bf16.mxu0 0
    %1714 = vmatpush1.bf16.msra.mxu0 %v1672
    %1715 = vmatprep.subr.bf16.mxu0 0
    %1716 = vmatpush1.bf16.msra.mxu0 %v1673
    %1717 = vmatprep.subr.bf16.mxu0 0
    %1718 = vmatpush1.bf16.msra.mxu0 %v1674
    %1719 = vmatprep.subr.bf16.mxu0 0
    %1720 = vmatpush1.bf16.msra.mxu0 %v1675
    %1721 = vmatprep.subr.bf16.mxu0 0
    %1722 = vmatpush1.bf16.msra.mxu0 %v1676
    %1723 = vmatprep.subr.bf16.mxu0 0
    %1724 = vmatpush1.bf16.msra.mxu0 %v1677
    %1725 = vmatprep.subr.bf16.mxu0 0
    %1726 = vmatpush1.bf16.msra.mxu0 %v1678
    %1727 = vmatprep.mubr.bf16.mxu0 %v1568
    %1728 = vmatmul.mubr.bf16.gmra.mrb[0].mxu0 %v1567
    %v1729 = vpop.f32.mrb[0].mxu0
    %v1730 = vadd.f32 %v1457, %v1729
    %v1731 = vpop.f32.mrb[0].mxu0
    %v1732 = vpop.f32.mrb[0].mxu0
    %v1733 = vadd.f32 %v1460, %v1732
    %v1734 = vpop.f32.mrb[0].mxu0
    %1735 = vmatprep.mubr.bf16.mxu0 %v1570
    %1736 = vmatmul.mubr.bf16.gmra.mrb[0].mxu0 %v1569
    %v1737 = vpop.f32.mrb[0].mxu0
    %v1738 = vadd.f32 %v1465, %v1737
    %v1739 = vpop.f32.mrb[0].mxu0
    %v1740 = vpop.f32.mrb[0].mxu0
    %v1741 = vadd.f32 %v1468, %v1740
    %v1742 = vpop.f32.mrb[0].mxu0
    %1743 = vmatprep.mubr.bf16.mxu0 %v1572
    %1744 = vmatmul.mubr.bf16.gmra.mrb[0].mxu0 %v1571
    %v1745 = vpop.f32.mrb[0].mxu0
    %v1746 = vadd.f32 %v1473, %v1745
    %v1747 = vpop.f32.mrb[0].mxu0
    %v1748 = vpop.f32.mrb[0].mxu0
    %v1749 = vadd.f32 %v1476, %v1748
    %v1750 = vpop.f32.mrb[0].mxu0
    %1751 = vmatprep.mubr.bf16.mxu0 %v1574
    %1752 = vmatmul.mubr.bf16.gmra.mrb[0].mxu0 %v1573
    %v1753 = vpop.f32.mrb[0].mxu0
    %v1754 = vadd.f32 %v1481, %v1753
    %v1755 = vpop.f32.mrb[0].mxu0
    %v1756 = vpop.f32.mrb[0].mxu0
    %v1757 = vadd.f32 %v1484, %v1756
    %v1758 = vpop.f32.mrb[0].mxu0
    %1759 = vmatprep.mubr.bf16.mxu0 %v1576
    %1760 = vmatmul.mubr.bf16.gmra.mrb[0].mxu0 %v1575
    %v1761 = vpop.f32.mrb[0].mxu0
    %v1762 = vadd.f32 %v1489, %v1761
    %v1763 = vpop.f32.mrb[0].mxu0
    %v1764 = vpop.f32.mrb[0].mxu0
    %v1765 = vadd.f32 %v1492, %v1764
    %v1766 = vpop.f32.mrb[0].mxu0
    %1767 = vmatprep.mubr.bf16.mxu0 %v1578
    %1768 = vmatmul.mubr.bf16.gmra.mrb[0].mxu0 %v1577
    %v1769 = vpop.f32.mrb[0].mxu0
    %v1770 = vadd.f32 %v1497, %v1769
    %v1771 = vpop.f32.mrb[0].mxu0
    %v1772 = vpop.f32.mrb[0].mxu0
    %v1773 = vadd.f32 %v1500, %v1772
    %v1774 = vpop.f32.mrb[0].mxu0
    %1775 = vmatprep.mubr.bf16.mxu0 %v1580
    %1776 = vmatmul.mubr.bf16.gmra.mrb[0].mxu0 %v1579
    %v1777 = vpop.f32.mrb[0].mxu0
    %v1778 = vadd.f32 %v1505, %v1777
    %v1779 = vpop.f32.mrb[0].mxu0
    %v1780 = vpop.f32.mrb[0].mxu0
    %v1781 = vadd.f32 %v1508, %v1780
    %v1782 = vpop.f32.mrb[0].mxu0
    %1783 = vmatprep.mubr.bf16.mxu0 %v1582
    %1784 = vmatmul.mubr.bf16.gmra.mrb[0].mxu0 %v1581
    %v1785 = vpop.f32.mrb[0].mxu0
    %v1786 = vadd.f32 %v1513, %v1785
    %v1787 = vpop.f32.mrb[0].mxu0
    %v1788 = vpop.f32.mrb[0].mxu0
    %v1789 = vadd.f32 %v1516, %v1788
    %v1790 = vpop.f32.mrb[0].mxu0
    %1791 = vdwg.mxu0
    %v1792 = vld [vmem:[%s9] sm:$0x1]
    %v1794 = vlaneseq
    %v1795 = vshrl.u32 %v1794, 7
    %v1796 = vsub.s32 0, %v1795
    %v1797 = vrot.slane %v1792, %v1796
    %v1799 = vadd.f32 %v1730, %v1797
    %v1800 = vadd.f32 %v1733, %v1797
    %v1801 = vadd.f32 %v1738, %v1797
    %v1802 = vadd.f32 %v1741, %v1797
    %v1803 = vadd.f32 %v1746, %v1797
    %v1804 = vadd.f32 %v1749, %v1797
    %v1805 = vadd.f32 %v1754, %v1797
    %v1806 = vadd.f32 %v1757, %v1797
    %v1807 = vadd.f32 %v1762, %v1797
    %v1808 = vadd.f32 %v1765, %v1797
    %v1809 = vadd.f32 %v1770, %v1797
    %v1810 = vadd.f32 %v1773, %v1797
    %v1811 = vadd.f32 %v1778, %v1797
    %v1812 = vadd.f32 %v1781, %v1797
    %v1813 = vadd.f32 %v1786, %v1797
    %v1814 = vadd.f32 %v1789, %v1797
    %v1815 = vmax.f32 %v1799, 0.0
    %v1816 = vmax.f32 %v1800, 0.0
    %v1817 = vmax.f32 %v1801, 0.0
    %v1818 = vmax.f32 %v1802, 0.0
    %v1819 = vmax.f32 %v1803, 0.0
    %v1820 = vmax.f32 %v1804, 0.0
    %v1821 = vmax.f32 %v1805, 0.0
    %v1822 = vmax.f32 %v1806, 0.0
    %v1823 = vmax.f32 %v1807, 0.0
    %v1824 = vmax.f32 %v1808, 0.0
    %v1825 = vmax.f32 %v1809, 0.0
    %v1826 = vmax.f32 %v1810, 0.0
    %v1827 = vmax.f32 %v1811, 0.0
    %v1828 = vmax.f32 %v1812, 0.0
    %v1829 = vmax.f32 %v1813, 0.0
    %v1830 = vmax.f32 %v1814, 0.0
    %v1831 = vld [vmem:[%s4] sm:$0xff]
    %1832 = vmatprep.subr.mxu0 0.0
    %1833 = vmatpush1.msra.mxu0 %v1815
    %1834 = vmatprep.subr.mxu0 0.0
    %1835 = vmatpush1.msra.mxu0 %v1816
    %1836 = vmatprep.subr.mxu0 0.0
    %1837 = vmatpush1.msra.mxu0 %v1817
    %1838 = vmatprep.subr.mxu0 0.0
    %1839 = vmatpush1.msra.mxu0 %v1818
    %1840 = vmatprep.subr.mxu0 0.0
    %1841 = vmatpush1.msra.mxu0 %v1819
    %1842 = vmatprep.subr.mxu0 0.0
    %1843 = vmatpush1.msra.mxu0 %v1820
    %1844 = vmatprep.subr.mxu0 0.0
    %1845 = vmatpush1.msra.mxu0 %v1821
    %1846 = vmatprep.subr.mxu0 0.0
    %1847 = vmatpush1.msra.mxu0 %v1822
    %1848 = vmatprep.subr.mxu0 0.0
    %1849 = vmatpush1.msra.mxu0 %v1823
    %1850 = vmatprep.subr.mxu0 0.0
    %1851 = vmatpush1.msra.mxu0 %v1824
    %1852 = vmatprep.subr.mxu0 0.0
    %1853 = vmatpush1.msra.mxu0 %v1825
    %1854 = vmatprep.subr.mxu0 0.0
    %1855 = vmatpush1.msra.mxu0 %v1826
    %1856 = vmatprep.subr.mxu0 0.0
    %1857 = vmatpush1.msra.mxu0 %v1827
    %1858 = vmatprep.subr.mxu0 0.0
    %1859 = vmatpush1.msra.mxu0 %v1828
    %1860 = vmatprep.subr.mxu0 0.0
    %1861 = vmatpush1.msra.mxu0 %v1829
    %1862 = vmatprep.subr.mxu0 0.0
    %1863 = vmatpush1.msra.mxu0 %v1830
    %1864 = vmatprep.subr.mxu0 0.0
    %1865 = vmatpush1.msra.mxu0 0.0
    %1866 = vmatprep.subr.mxu0 0.0
    %1867 = vmatpush1.msra.mxu0 0.0
    %1868 = vmatprep.subr.mxu0 0.0
    %1869 = vmatpush1.msra.mxu0 0.0
    %1870 = vmatprep.subr.mxu0 0.0
    %1871 = vmatpush1.msra.mxu0 0.0
    %1872 = vmatprep.subr.mxu0 0.0
    %1873 = vmatpush1.msra.mxu0 0.0
    %1874 = vmatprep.subr.mxu0 0.0
    %1875 = vmatpush1.msra.mxu0 0.0
    %1876 = vmatprep.subr.mxu0 0.0
    %1877 = vmatpush1.msra.mxu0 0.0
    %1878 = vmatprep.subr.mxu0 0.0
    %1879 = vmatpush1.msra.mxu0 0.0
    %1880 = vmatprep.subr.mxu0 0.0
    %1881 = vmatpush1.msra.mxu0 0.0
    %1882 = vmatprep.subr.mxu0 0.0
    %1883 = vmatpush1.msra.mxu0 0.0
    %1884 = vmatprep.subr.mxu0 0.0
    %1885 = vmatpush1.msra.mxu0 0.0
    %1886 = vmatprep.subr.mxu0 0.0
    %1887 = vmatpush1.msra.mxu0 0.0
    %1888 = vmatprep.subr.mxu0 0.0
    %1889 = vmatpush1.msra.mxu0 0.0
    %1890 = vmatprep.subr.mxu0 0.0
    %1891 = vmatpush1.msra.mxu0 0.0
    %1892 = vmatprep.subr.mxu0 0.0
    %1893 = vmatpush1.msra.mxu0 0.0
    %1894 = vmatprep.subr.mxu0 0.0
    %1895 = vmatpush1.msra.mxu0 0.0
    %1896 = vmatprep.mubr.f32.mxu0 0.0
    %1897 = vmatmul.mubr.f32.gmra.mrb[0].mxu0 %v1831
    %v1898 = vpop.f32.mrb[0].mxu0
    %v1899 = vadd.f32 0.0, %v1898
    %v1900 = vpop.f32.mrb[0].mxu0
    %1901 = vdwg.mxu0
    %v1902 = vpack.c.bf16 %v1899, %v1899
    %v1903 = vld [vmem:[#allocation15] sm:$0xf]
    %v1904 = vld [vmem:[#allocation15 + $0x4] sm:$0xf]
    %v1905 = vld [vmem:[#allocation15 + $0x8] sm:$0xf]
    %v1906 = vld [vmem:[#allocation15 + $0xc] sm:$0xf]
    %v1907 = vld [vmem:[#allocation15 + $0x10] sm:$0xf]
    %v1908 = vld [vmem:[#allocation15 + $0x14] sm:$0xf]
    %v1909 = vld [vmem:[#allocation15 + $0x18] sm:$0xf]
    %v1910 = vld [vmem:[#allocation15 + $0x1c] sm:$0xf]
    %v1911 = vld [vmem:[#allocation15 + $0x20] sm:$0xf]
    %v1912 = vld [vmem:[#allocation15 + $0x24] sm:$0xf]
    %v1913 = vld [vmem:[#allocation15 + $0x28] sm:$0xf]
    %v1914 = vld [vmem:[#allocation15 + $0x2c] sm:$0xf]
    %v1915 = vld [vmem:[#allocation15 + $0x30] sm:$0xf]
    %v1916 = vld [vmem:[#allocation15 + $0x34] sm:$0xf]
    %v1917 = vld [vmem:[#allocation15 + $0x38] sm:$0xf]
    %v1918 = vld [vmem:[#allocation15 + $0x3c] sm:$0xf]
    %v1919 = vld [vmem:[%s11] sm:$0x1]
    %v1921 = vlaneseq
    %v1922 = vshrl.u32 %v1921, 7
    %v1923 = vsub.s32 0, %v1922
    %v1924 = vrot.slane %v1919, %v1923
    %v1942 = vunpack.c.l.b16 %v1903
    %v1943 = vunpack.c.l.b16 %v1904
    %v1944 = vunpack.c.l.b16 %v1905
    %v1945 = vunpack.c.l.b16 %v1906
    %v1946 = vunpack.c.l.b16 %v1907
    %v1947 = vunpack.c.l.b16 %v1908
    %v1948 = vunpack.c.l.b16 %v1909
    %v1949 = vunpack.c.l.b16 %v1910
    %v1950 = vunpack.c.l.b16 %v1911
    %v1951 = vunpack.c.l.b16 %v1912
    %v1952 = vunpack.c.l.b16 %v1913
    %v1953 = vunpack.c.l.b16 %v1914
    %v1954 = vunpack.c.l.b16 %v1915
    %v1955 = vunpack.c.l.b16 %v1916
    %v1956 = vunpack.c.l.b16 %v1917
    %v1957 = vunpack.c.l.b16 %v1918
    %v1958 = vpack.c.b16 %v1943, %v1942
    %v1959 = vpack.c.b16 %v1945, %v1944
    %v1960 = vpack.c.b16 %v1947, %v1946
    %v1961 = vpack.c.b16 %v1949, %v1948
    %v1962 = vpack.c.b16 %v1951, %v1950
    %v1963 = vpack.c.b16 %v1953, %v1952
    %v1964 = vpack.c.b16 %v1955, %v1954
    %v1965 = vpack.c.b16 %v1957, %v1956
    %1974 = vmatprep.subr.bf16.mxu0 0
    %1975 = vmatpush1.bf16.msra.mxu0 %v1958
    %1976 = vmatprep.subr.bf16.mxu0 0
    %1977 = vmatpush1.bf16.msra.mxu0 %v1959
    %1978 = vmatprep.subr.bf16.mxu0 0
    %1979 = vmatpush1.bf16.msra.mxu0 %v1960
    %1980 = vmatprep.subr.bf16.mxu0 0
    %1981 = vmatpush1.bf16.msra.mxu0 %v1961
    %1982 = vmatprep.subr.bf16.mxu0 0
    %1983 = vmatpush1.bf16.msra.mxu0 %v1962
    %1984 = vmatprep.subr.bf16.mxu0 0
    %1985 = vmatpush1.bf16.msra.mxu0 %v1963
    %1986 = vmatprep.subr.bf16.mxu0 0
    %1987 = vmatpush1.bf16.msra.mxu0 %v1964
    %1988 = vmatprep.subr.bf16.mxu0 0
    %1989 = vmatpush1.bf16.msra.mxu0 %v1965
    %1990 = vmatprep.subr.bf16.mxu0 0
    %1991 = vmatpush1.bf16.msra.mxu0 0
    %1992 = vmatprep.subr.bf16.mxu0 0
    %1993 = vmatpush1.bf16.msra.mxu0 0
    %1994 = vmatprep.subr.bf16.mxu0 0
    %1995 = vmatpush1.bf16.msra.mxu0 0
    %1996 = vmatprep.subr.bf16.mxu0 0
    %1997 = vmatpush1.bf16.msra.mxu0 0
    %1998 = vmatprep.subr.bf16.mxu0 0
    %1999 = vmatpush1.bf16.msra.mxu0 0
    %2000 = vmatprep.subr.bf16.mxu0 0
    %2001 = vmatpush1.bf16.msra.mxu0 0
    %2002 = vmatprep.subr.bf16.mxu0 0
    %2003 = vmatpush1.bf16.msra.mxu0 0
    %2004 = vmatprep.subr.bf16.mxu0 0
    %2005 = vmatpush1.bf16.msra.mxu0 0
    %2006 = vmatprep.mubr.bf16.mxu0 0
    %2007 = vmatmul.mubr.bf16.gmra.mrb[0].mxu0 %v1902
    %v2008 = vpop.f32.mrb[0].mxu0
    %v2009 = vadd.f32 %v1924, %v2008
    %v2010 = vpop.f32.mrb[0].mxu0
    %v2011 = vpop.f32.mrb[0].mxu0
    %v2012 = vpop.f32.mrb[0].mxu0
    %2013 = vdwg.mxu0
    %v2014 = vmax.f32 %v2009, 0.0
    %v2015 = vpack.c.bf16 %v2014, %v2014
    %v2016 = vld [vmem:[#allocation16] sm:$0xf]
    %v2017 = vld [vmem:[#allocation16 + $0x4] sm:$0xf]
    %v2018 = vld [vmem:[#allocation16 + $0x8] sm:$0xf]
    %v2019 = vld [vmem:[#allocation16 + $0xc] sm:$0xf]
    %v2020 = vld [vmem:[#allocation16 + $0x10] sm:$0xf]
    %v2021 = vld [vmem:[#allocation16 + $0x14] sm:$0xf]
    %v2022 = vld [vmem:[#allocation16 + $0x18] sm:$0xf]
    %v2023 = vld [vmem:[#allocation16 + $0x1c] sm:$0xf]
    %v2024 = vld [vmem:[#allocation16 + $0x20] sm:$0xf]
    %v2025 = vld [vmem:[#allocation16 + $0x24] sm:$0xf]
    %v2026 = vld [vmem:[#allocation16 + $0x28] sm:$0xf]
    %v2027 = vld [vmem:[#allocation16 + $0x2c] sm:$0xf]
    %v2028 = vld [vmem:[#allocation16 + $0x30] sm:$0xf]
    %v2029 = vld [vmem:[#allocation16 + $0x34] sm:$0xf]
    %v2030 = vld [vmem:[#allocation16 + $0x38] sm:$0xf]
    %v2031 = vld [vmem:[#allocation16 + $0x3c] sm:$0xf]
    %v2032 = vld [vmem:[%s13] sm:$0x1]
    %v2034 = vlaneseq
    %v2035 = vshrl.u32 %v2034, 7
    %v2036 = vsub.s32 0, %v2035
    %v2037 = vrot.slane %v2032, %v2036
    %v2055 = vunpack.c.l.b16 %v2016
    %v2056 = vunpack.c.l.b16 %v2017
    %v2057 = vunpack.c.l.b16 %v2018
    %v2058 = vunpack.c.l.b16 %v2019
    %v2059 = vunpack.c.l.b16 %v2020
    %v2060 = vunpack.c.l.b16 %v2021
    %v2061 = vunpack.c.l.b16 %v2022
    %v2062 = vunpack.c.l.b16 %v2023
    %v2063 = vunpack.c.l.b16 %v2024
    %v2064 = vunpack.c.l.b16 %v2025
    %v2065 = vunpack.c.l.b16 %v2026
    %v2066 = vunpack.c.l.b16 %v2027
    %v2067 = vunpack.c.l.b16 %v2028
    %v2068 = vunpack.c.l.b16 %v2029
    %v2069 = vunpack.c.l.b16 %v2030
    %v2070 = vunpack.c.l.b16 %v2031
    %v2071 = vpack.c.b16 %v2056, %v2055
    %v2072 = vpack.c.b16 %v2058, %v2057
    %v2073 = vpack.c.b16 %v2060, %v2059
    %v2074 = vpack.c.b16 %v2062, %v2061
    %v2075 = vpack.c.b16 %v2064, %v2063
    %v2076 = vpack.c.b16 %v2066, %v2065
    %v2077 = vpack.c.b16 %v2068, %v2067
    %v2078 = vpack.c.b16 %v2070, %v2069
    %2087 = vmatprep.subr.bf16.mxu0 0
    %2088 = vmatpush1.bf16.msra.mxu0 %v2071
    %2089 = vmatprep.subr.bf16.mxu0 0
    %2090 = vmatpush1.bf16.msra.mxu0 %v2072
    %2091 = vmatprep.subr.bf16.mxu0 0
    %2092 = vmatpush1.bf16.msra.mxu0 %v2073
    %2093 = vmatprep.subr.bf16.mxu0 0
    %2094 = vmatpush1.bf16.msra.mxu0 %v2074
    %2095 = vmatprep.subr.bf16.mxu0 0
    %2096 = vmatpush1.bf16.msra.mxu0 %v2075
    %2097 = vmatprep.subr.bf16.mxu0 0
    %2098 = vmatpush1.bf16.msra.mxu0 %v2076
    %2099 = vmatprep.subr.bf16.mxu0 0
    %2100 = vmatpush1.bf16.msra.mxu0 %v2077
    %2101 = vmatprep.subr.bf16.mxu0 0
    %2102 = vmatpush1.bf16.msra.mxu0 %v2078
    %2103 = vmatprep.subr.bf16.mxu0 0
    %2104 = vmatpush1.bf16.msra.mxu0 0
    %2105 = vmatprep.subr.bf16.mxu0 0
    %2106 = vmatpush1.bf16.msra.mxu0 0
    %2107 = vmatprep.subr.bf16.mxu0 0
    %2108 = vmatpush1.bf16.msra.mxu0 0
    %2109 = vmatprep.subr.bf16.mxu0 0
    %2110 = vmatpush1.bf16.msra.mxu0 0
    %2111 = vmatprep.subr.bf16.mxu0 0
    %2112 = vmatpush1.bf16.msra.mxu0 0
    %2113 = vmatprep.subr.bf16.mxu0 0
    %2114 = vmatpush1.bf16.msra.mxu0 0
    %2115 = vmatprep.subr.bf16.mxu0 0
    %2116 = vmatpush1.bf16.msra.mxu0 0
    %2117 = vmatprep.subr.bf16.mxu0 0
    %2118 = vmatpush1.bf16.msra.mxu0 0
    %2119 = vmatprep.mubr.bf16.mxu0 0
    %2120 = vmatmul.mubr.bf16.gmra.mrb[0].mxu0 %v2015
    %v2121 = vpop.f32.mrb[0].mxu0
    %v2122 = vadd.f32 %v2037, %v2121
    %v2123 = vpop.f32.mrb[0].mxu0
    %v2124 = vpop.f32.mrb[0].mxu0
    %v2125 = vpop.f32.mrb[0].mxu0
    %2126 = vdwg.mxu0
    %2127 = vst [vmem:[%s14] sm:$0xff] %v2122
    // Predicated region
    $region98: #{dmpnn_forward.1} parent=1 // pred_check
      _
    $region99: #{dmpnn_forward.1} parent=1 // pred_check_branch
      %2129 = sbr.rel (0) target = $region101
    $region100: #{dmpnn_forward.1} parent=1 // pred_region
      _
    $region101: #{dmpnn_forward.1} parent=1 // pred_fallthru
      _
    // Predicated region
    $region102: #{dmpnn_forward.1} parent=1 // pred_check
      _
    $region103: #{dmpnn_forward.1} parent=1 // pred_check_branch
      %2131 = sbr.rel (0) target = $region105
    $region104: #{dmpnn_forward.1} parent=1 // pred_region
      _
    $region105: #{dmpnn_forward.1} parent=1 // pred_fallthru
      _
    %2132 = vsyncpa [#allocation3], 1
    %2133 = vsyncpa [#allocation5], 1
    %2134 = vsyncpa [#allocation8], 1
    %2135 = vsyncpa [#allocation11], 1
    %2136 = vsyncpa [#allocation14], 1
    %2137 = vsyncpa [#allocation17], 1

</llo_original>
